<compile_context>
chip_gen: v5e
topology: v5e:2x2
jax: 0.10.0
libtpu: 0.0.40
codegen_flags: <defaults>
</compile_context>

<pallas_src>
import functools
import math

import jax
import jax.numpy as jnp
from jax import lax
from jax.experimental import pallas as pl
from jax.experimental.pallas import tpu as pltpu

MIB = 1024 * 1024


def _round_up(x, m):
    return (x + m - 1) // m * m


def _pick_tile(dim, target, step):
    """Largest tile <= target that divides dim (dim is a multiple of step)."""
    t = min(target, dim)
    while dim % t != 0:
        t -= step
    return max(t, step)


def _compiler_params(semantics, vmem_bytes_needed):
    # Explicit scoped-VMEM limit, clamped so it is valid on every generation
    # (v7x has 64 MiB physical VMEM; leave headroom).
    limit = int(min(max(2 * vmem_bytes_needed, 8 * MIB), 48 * MIB))
    return pltpu.CompilerParams(
        dimension_semantics=semantics,
        vmem_limit_bytes=limit,
    )


# ----------------------------------------------------------------------------
# Tiled matmul + bias (+ optional ReLU):  y = act(x @ w + b)
#   x: (M, K) f32,  w: (K, N) bf16,  b: (1, N) f32  ->  y: (M, N) f32
# Grid (M/tm, N/tn, K/tk); f32 accumulator in VMEM scratch; bias/activation
# applied on the last K tile.  Used for the hoisted RNN input projections and
# both dense layers of the head.
# ----------------------------------------------------------------------------
def _matmul_bias_kernel(x_ref, w_ref, b_ref, o_ref, acc_ref, *, activation):
    k = pl.program_id(2)

    @pl.when(k == 0)
    def _():
        acc_ref[...] = jnp.zeros_like(acc_ref)

    acc_ref[...] += jnp.dot(
        x_ref[...].astype(jnp.bfloat16),     # bf16 MXU inputs
        w_ref[...],                          # already bf16
        preferred_element_type=jnp.float32,  # f32 accumulation
    )

    @pl.when(k == pl.num_programs(2) - 1)
    def _():
        y = acc_ref[...] + b_ref[...]        # f32 elementwise
        if activation == "relu":
            y = jnp.maximum(y, 0.0)
        o_ref[...] = y.astype(o_ref.dtype)


def matmul_bias(x, w_bf16, b, *, activation=None,
                tm_max=256, tn_max=512, tk_max=512):
    M, K = x.shape
    K2, N = w_bf16.shape
    assert K == K2 and b.shape == (1, N)
    tm = _pick_tile(M, tm_max, 8)
    tn = _pick_tile(N, tn_max, 128)
    tk = _pick_tile(K, tk_max, 128)
    grid = (M // tm, N // tn, K // tk)

    vmem_est = (2 * tm * tk * 4        # x tiles (double-buffered, f32)
                + 2 * tk * tn * 2      # w tiles (double-buffered, bf16)
                + 2 * tn * 4           # bias tiles
                + 2 * tm * tn * 4      # output tiles
                + tm * tn * 4)         # accumulator scratch

    kernel = functools.partial(_matmul_bias_kernel, activation=activation)
    return pl.pallas_call(
        kernel,
        out_shape=jax.ShapeDtypeStruct((M, N), jnp.float32),
        grid_spec=pltpu.PrefetchScalarGridSpec(
            num_scalar_prefetch=0,
            grid=grid,
            in_specs=[
                pl.BlockSpec((tm, tk), lambda i, j, k: (i, k)),
                pl.BlockSpec((tk, tn), lambda i, j, k: (k, j)),
                pl.BlockSpec((1, tn), lambda i, j, k: (0, j)),
            ],
            out_specs=pl.BlockSpec((tm, tn), lambda i, j, k: (i, j)),
            scratch_shapes=[pltpu.VMEM((tm, tn), jnp.float32)],
        ),
        compiler_params=_compiler_params(
            ("parallel", "parallel", "arbitrary"), vmem_est),
    )(x, w_bf16, b)


# ----------------------------------------------------------------------------
# RNN recurrence:  h_t = tanh(P_t + h_{t-1} @ W_hh)   (P = x @ W_ih + bias,
# precomputed).  Each grid step covers `chunk` consecutive timesteps with an
# unrolled in-kernel loop; hidden state carried in VMEM scratch; W_hh lives in
# HBM and is DMA'd ONCE into a single (non-double-buffered) VMEM buffer.
# ----------------------------------------------------------------------------
def _rnn_recurrence_kernel(p_ref, whh_hbm_ref, out_ref,
                           h_scratch, whh_vmem, dma_sem, *, chunk):
    t = pl.program_id(0)

    @pl.when(t == 0)
    def _():
        # Single resident copy of W_hh (a blocked input spec would allocate a
        # second, useless double buffer for a block whose index never changes).
        cp = pltpu.make_async_copy(whh_hbm_ref, whh_vmem, dma_sem)
        cp.start()
        cp.wait()
        h_scratch[...] = jnp.zeros_like(h_scratch)

    whh = whh_vmem[...]                        # resident bf16 W_hh

    def step(i, h):
        pre = p_ref[i] + jnp.dot(
            h.astype(jnp.bfloat16),            # bf16 MXU input
            whh,
            preferred_element_type=jnp.float32,  # f32 accumulation
        )
        h_new = jnp.tanh(pre)                  # f32 elementwise (EUP)
        out_ref[i] = h_new
        return h_new

    h_final = lax.fori_loop(0, chunk, step, h_scratch[...], unroll=True)
    h_scratch[...] = h_final


def rnn_recurrence(p_seq, whh_bf16, *, chunk_max=8):
    """p_seq: (S, Bp, Hp) f32;  whh_bf16: (Hp, Hp) bf16  ->  (S, Bp, Hp) f32."""
    S, Bp, Hp = p_seq.shape
    chunk = _pick_tile(S, chunk_max, 1)
    vmem_est = (2 * chunk * Bp * Hp * 4   # P tiles (double-buffered)
                + Hp * Hp * 2             # resident W_hh (single bf16 buffer)
                + 2 * chunk * Bp * Hp * 4  # output tiles
                + Bp * Hp * 4)            # hidden-state scratch
    kernel = functools.partial(_rnn_recurrence_kernel, chunk=chunk)
    return pl.pallas_call(
        kernel,
        out_shape=jax.ShapeDtypeStruct((S, Bp, Hp), jnp.float32),
        grid_spec=pltpu.PrefetchScalarGridSpec(
            num_scalar_prefetch=0,
            grid=(S // chunk,),
            in_specs=[
                pl.BlockSpec((chunk, Bp, Hp), lambda t: (t, 0, 0)),
                pl.BlockSpec(memory_space=pl.ANY),   # W_hh stays in HBM
            ],
            out_specs=pl.BlockSpec((chunk, Bp, Hp), lambda t: (t, 0, 0)),
            scratch_shapes=[
                pltpu.VMEM((Bp, Hp), jnp.float32),   # h_{t-1}
                pltpu.VMEM((Hp, Hp), jnp.bfloat16),  # resident W_hh
                pltpu.SemaphoreType.DMA,
            ],
        ),
        compiler_params=_compiler_params(("arbitrary",), vmem_est),
    )(p_seq, whh_bf16)


# ----------------------------------------------------------------------------
# Full MidiRNN forward (padded, bf16-weight kernel parameters).
# ----------------------------------------------------------------------------
def midi_rnn_forward(x, kp):
    """x: (S, B, DIM) f32 -> (S, B, DIM) f32."""
    S, B, D = x.shape
    Bp = _round_up(max(B, 8), 8)
    Dp = kp["rnn"][0]["w_ih_t"].shape[0]
    Hp = kp["rnn"][0]["w_hh_t"].shape[0]

    # Zero-pad batch to 8 sublanes and features to 128 lanes.
    xp = jnp.zeros((S, Bp, Dp), jnp.float32).at[:, :B, :D].set(x)

    h_seq = xp
    for layer in kp["rnn"]:
        feat = h_seq.shape[-1]
        # Hoisted input projection over ALL timesteps: one tiled MXU matmul.
        p = matmul_bias(h_seq.reshape(S * Bp, feat),
                        layer["w_ih_t"], layer["b"])
        # Truly sequential part: tanh(P_t + h_{t-1} @ W_hh).
        h_seq = rnn_recurrence(p.reshape(S, Bp, Hp), layer["w_hh_t"])

    d = kp["dense"]
    hid = matmul_bias(h_seq.reshape(S * Bp, Hp), d["w1_t"], d["b1"],
                      activation="relu")
    out = matmul_bias(hid, d["w2_t"], d["b2"])
    return out.reshape(S, Bp, -1)[:, :B, :D]


# ----------------------------------------------------------------------------
# Pure-JAX reference (PyTorch semantics, f32 activations, weights rounded to
# bf16 to match the kernels' weight storage).
# ----------------------------------------------------------------------------
def midi_rnn_reference(x, params):
    rb = lambda w: w.astype(jnp.bfloat16).astype(jnp.float32)
    S, B, _ = x.shape
    h_seq = x
    for layer in params["rnn"]:
        H = layer["w_hh_t"].shape[0]
        wih, whh, b = rb(layer["w_ih_t"]), rb(layer["w_hh_t"]), layer["b"]
        h = jnp.zeros((B, H), jnp.float32)
        outs = []
        for t in range(S):
            h = jnp.tanh(h_seq[t] @ wih + h @ whh + b)
            outs.append(h)
        h_seq = jnp.stack(outs, axis=0)
    d = params["dense"]
    hid = jnp.maximum(h_seq @ rb(d["w1_t"]) + d["b1"], 0.0)
    return hid @ rb(d["w2_t"]) + d["b2"]


# ----------------------------------------------------------------------------
# Parameter init (PyTorch-style uniform(-1/sqrt(H), 1/sqrt(H))) + kernel prep.
# ----------------------------------------------------------------------------
def init_params(key, dim, hidden, num_layers):
    k = 1.0 / math.sqrt(hidden)

    def unif(key, shape):
        return jax.random.uniform(key, shape, jnp.float32, -k, k)

    keys = jax.random.split(key, num_layers * 4 + 4)
    rnn_layers, ki = [], 0
    for layer in range(num_layers):
        d_in = dim if layer == 0 else hidden
        w_ih = unif(keys[ki], (hidden, d_in)); ki += 1    # weight_ih_l{l}
        w_hh = unif(keys[ki], (hidden, hidden)); ki += 1  # weight_hh_l{l}
        b_ih = unif(keys[ki], (hidden,)); ki += 1
        b_hh = unif(keys[ki], (hidden,)); ki += 1
        rnn_layers.append({
            "w_ih_t": w_ih.T,                        # (d_in, H)
            "w_hh_t": w_hh.T,                        # (H, H)
            "b": (b_ih + b_hh).reshape(1, hidden),   # combined bias
        })
    w1 = unif(keys[ki], (hidden, hidden)); ki += 1
    b1 = unif(keys[ki], (hidden,)); ki += 1
    w2 = unif(keys[ki], (dim, hidden)); ki += 1
    b2 = unif(keys[ki], (dim,)); ki += 1
    dense = {"w1_t": w1.T, "b1": b1.reshape(1, hidden),
             "w2_t": w2.T, "b2": b2.reshape(1, dim)}
    return {"rnn": rnn_layers, "dense": dense}


def prepare_kernel_params(params, dim, hidden):
    """Pad to (8,128)-friendly shapes and cast weights to bf16 (biases f32)."""
    Dp, Hp = _round_up(dim, 128), _round_up(hidden, 128)

    def pad2(w, r, c):
        return jnp.zeros((r, c), w.dtype).at[:w.shape[0], :w.shape[1]].set(w)

    rnn = []
    for i, layer in enumerate(params["rnn"]):
        in_p = Dp if i == 0 else Hp
        rnn.append({
            "w_ih_t": pad2(layer["w_ih_t"], in_p, Hp).astype(jnp.bfloat16),
            "w_hh_t": pad2(layer["w_hh_t"], Hp, Hp).astype(jnp.bfloat16),
            "b": pad2(layer["b"], 1, Hp),
        })
    d = params["dense"]
    dense = {
        "w1_t": pad2(d["w1_t"], Hp, Hp).astype(jnp.bfloat16),
        "b1": pad2(d["b1"], 1, Hp),
        "w2_t": pad2(d["w2_t"], Hp, Dp).astype(jnp.bfloat16),
        "b2": pad2(d["b2"], 1, Dp),
    }
    return {"rnn": rnn, "dense": dense}


if __name__ == "__main__":
    DIM = 32        # stands in for util.DIM
    HIDDEN = 32     # stands in for 5000 (padded to 128 inside the kernels)
    NUM_LAYERS = 2
    SEQ, BATCH = 8, 2

    key = jax.random.PRNGKey(0)
    kx, kp_key = jax.random.split(key)
    x = jax.random.normal(kx, (SEQ, BATCH, DIM), jnp.float32)
    params = init_params(kp_key, DIM, HIDDEN, NUM_LAYERS)
    kparams = prepare_kernel_params(params, DIM, HIDDEN)

    fwd = jax.jit(midi_rnn_forward)
    out = jax.block_until_ready(fwd(x, kparams))

    ref = midi_rnn_reference(x, params)
    assert out.shape == (SEQ, BATCH, DIM)
    max_err = float(jnp.max(jnp.abs(out - ref)))
    assert jnp.allclose(out, ref, atol=5e-2, rtol=5e-2), \
        f"mismatch vs reference (max abs err {max_err})"

    print("KERNEL_OK")
</pallas_src>

<mosaic_0001>
module attributes {stable_mosaic.version = 11 : i64} {
  func.func @_matmul_bias_kernel(%arg0: i32, %arg1: i32, %arg2: i32, %arg3: memref<64x128xf32, #tpu.memory_space<vmem>>, %arg4: memref<128x128xbf16, #tpu.memory_space<vmem>>, %arg5: memref<1x128xf32, #tpu.memory_space<vmem>>, %arg6: memref<64x128xf32, #tpu.memory_space<vmem>>, %arg7: memref<64x128xf32, #tpu.memory_space<vmem>>) attributes {dimension_semantics = [#tpu.dimension_semantics<parallel>, #tpu.dimension_semantics<parallel>, #tpu.dimension_semantics<arbitrary>], iteration_bounds = array<i64: 1, 1, 1>, scalar_prefetch = 0 : i64, scratch_operands = 1 : i64, tpu.core_type = #tpu.core_type<tc>, window_params = [{transform_indices = @transform_0, window_bounds = array<i64: 64, 128>}, {transform_indices = @transform_1, window_bounds = array<i64: 128, 128>}, {transform_indices = @transform_2, window_bounds = array<i64: 1, 128>}, {transform_indices = @transform_3, window_bounds = array<i64: 64, 128>}]} {
    %c0_i32 = arith.constant 0 : i32
    %0 = arith.cmpi eq, %arg2, %c0_i32 : i32
    %1 = arith.extui %0 : i1 to i32
    %c0_i32_0 = arith.constant 0 : i32
    %2 = arith.cmpi ne, %1, %c0_i32_0 : i32
    scf.if %2 {
      %cst_10 = arith.constant 0.000000e+00 : f32
      %13 = vector.broadcast %cst_10 : f32 to vector<64x128xf32>
      %c0_11 = arith.constant 0 : index
      %c0_12 = arith.constant 0 : index
      %14 = vector.load %arg7[%c0_11, %c0_12] : memref<64x128xf32, #tpu.memory_space<vmem>>, vector<64x128xf32>
      tpu.vector_store %arg7[%c0_11, %c0_12], %13 {strides = array<i32>} : memref<64x128xf32, #tpu.memory_space<vmem>>, vector<64x128xf32>,
    } else {
    }
    %c0 = arith.constant 0 : index
    %c0_1 = arith.constant 0 : index
    %3 = vector.load %arg7[%c0, %c0_1] : memref<64x128xf32, #tpu.memory_space<vmem>>, vector<64x128xf32>
    %c0_2 = arith.constant 0 : index
    %c0_3 = arith.constant 0 : index
    %4 = vector.load %arg3[%c0_2, %c0_3] : memref<64x128xf32, #tpu.memory_space<vmem>>, vector<64x128xf32>
    %5 = arith.truncf %4 : vector<64x128xf32> to vector<64x128xbf16>
    %c0_4 = arith.constant 0 : index
    %c0_5 = arith.constant 0 : index
    %6 = vector.load %arg4[%c0_4, %c0_5] : memref<128x128xbf16, #tpu.memory_space<vmem>>, vector<128x128xbf16>
    %cst = arith.constant dense<0.000000e+00> : vector<64x128xf32>
    %7 = tpu.matmul %5, %6, %cst {dimension_numbers = #tpu.dot_dimension_numbers<[1], [0], [0], [1], [0, 0, 1, 1], [], []>} : vector<64x128xbf16>, vector<128x128xbf16>, vector<64x128xf32> -> vector<64x128xf32>
    %8 = arith.addf %3, %7 : vector<64x128xf32>
    %c0_6 = arith.constant 0 : index
    %c0_7 = arith.constant 0 : index
    %9 = vector.load %arg7[%c0_6, %c0_7] : memref<64x128xf32, #tpu.memory_space<vmem>>, vector<64x128xf32>
    tpu.vector_store %arg7[%c0_6, %c0_7], %8 {strides = array<i32>} : memref<64x128xf32, #tpu.memory_space<vmem>>, vector<64x128xf32>,
    %c0_i32_8 = arith.constant 0 : i32
    %10 = arith.cmpi eq, %arg2, %c0_i32_8 : i32
    %11 = arith.extui %10 : i1 to i32
    %c0_i32_9 = arith.constant 0 : i32
    %12 = arith.cmpi ne, %11, %c0_i32_9 : i32
    scf.if %12 {
      %c0_10 = arith.constant 0 : index
      %c0_11 = arith.constant 0 : index
      %13 = vector.load %arg7[%c0_10, %c0_11] : memref<64x128xf32, #tpu.memory_space<vmem>>, vector<64x128xf32>
      %c0_12 = arith.constant 0 : index
      %c0_13 = arith.constant 0 : index
      %14 = vector.load %arg5[%c0_12, %c0_13] : memref<1x128xf32, #tpu.memory_space<vmem>>, vector<1x128xf32>
      %15 = vector.broadcast %14 : vector<1x128xf32> to vector<64x128xf32>
      %16 = arith.addf %13, %15 : vector<64x128xf32>
      %c0_14 = arith.constant 0 : index
      %c0_15 = arith.constant 0 : index
      %17 = vector.load %arg6[%c0_14, %c0_15] : memref<64x128xf32, #tpu.memory_space<vmem>>, vector<64x128xf32>
      tpu.vector_store %arg6[%c0_14, %c0_15], %16 {strides = array<i32>} : memref<64x128xf32, #tpu.memory_space<vmem>>, vector<64x128xf32>,
    } else {
    }
    return
  }
  func.func @transform_0(%arg0: i32, %arg1: i32, %arg2: i32) -> (i32, i32) {
    %c0_i32 = arith.constant 0 : i32
    return %arg0, %arg2 : i32, i32
  }
  func.func @transform_1(%arg0: i32, %arg1: i32, %arg2: i32) -> (i32, i32) {
    %c0_i32 = arith.constant 0 : i32
    return %arg2, %arg1 : i32, i32
  }
  func.func @transform_2(%arg0: i32, %arg1: i32, %arg2: i32) -> (i32, i32) {
    %c0_i32 = arith.constant 0 : i32
    %c0_i32_0 = arith.constant 0 : i32
    return %c0_i32, %arg1 : i32, i32
  }
  func.func @transform_3(%arg0: i32, %arg1: i32, %arg2: i32) -> (i32, i32) {
    %c0_i32 = arith.constant 0 : i32
    return %arg0, %arg1 : i32, i32
  }
}

module attributes {stable_mosaic.version = 11 : i64} {
  func.func @_rnn_recurrence_kernel(%arg0: i32, %arg1: memref<8x8x128xf32, #tpu.memory_space<vmem>>, %arg2: memref<128x128xbf16, #tpu.memory_space<any>>, %arg3: memref<8x8x128xf32, #tpu.memory_space<vmem>>, %arg4: memref<8x128xf32, #tpu.memory_space<vmem>>, %arg5: memref<128x128xbf16, #tpu.memory_space<vmem>>, %arg6: memref<!tpu.dma_semaphore, #tpu.memory_space<semaphore_mem>>) attributes {dimension_semantics = [#tpu.dimension_semantics<arbitrary>], iteration_bounds = array<i64: 1>, scalar_prefetch = 0 : i64, scratch_operands = 3 : i64, tpu.core_type = #tpu.core_type<tc>, window_params = [{transform_indices = @transform_0, window_bounds = array<i64: 8, 8, 128>}, {}, {transform_indices = @transform_2, window_bounds = array<i64: 8, 8, 128>}]} {
    %c0_i32 = arith.constant 0 : i32
    %0 = arith.cmpi eq, %arg0, %c0_i32 : i32
    %1 = arith.extui %0 : i1 to i32
    %c0_i32_0 = arith.constant 0 : i32
    %2 = arith.cmpi ne, %1, %c0_i32_0 : i32
    scf.if %2 {
      tpu.enqueue_dma source(%arg2 : memref<128x128xbf16, #tpu.memory_space<any>>) target(%arg5 : memref<128x128xbf16, #tpu.memory_space<vmem>>) target_semaphore(%arg6 : memref<!tpu.dma_semaphore, #tpu.memory_space<semaphore_mem>>)
      tpu.wait_dma2 semaphore(%arg6 : memref<!tpu.dma_semaphore, #tpu.memory_space<semaphore_mem>>) src(%arg2 : memref<128x128xbf16, #tpu.memory_space<any>>) dst(%arg5 : memref<128x128xbf16, #tpu.memory_space<vmem>>)
      %cst_46 = arith.constant 0.000000e+00 : f32
      %94 = vector.broadcast %cst_46 : f32 to vector<8x128xf32>
      %c0_47 = arith.constant 0 : index
      %c0_48 = arith.constant 0 : index
      %95 = vector.load %arg4[%c0_47, %c0_48] : memref<8x128xf32, #tpu.memory_space<vmem>>, vector<8x128xf32>
      tpu.vector_store %arg4[%c0_47, %c0_48], %94 {strides = array<i32>} : memref<8x128xf32, #tpu.memory_space<vmem>>, vector<8x128xf32>,
    } else {
    }
    %c0 = arith.constant 0 : index
    %c0_1 = arith.constant 0 : index
    %3 = vector.load %arg5[%c0, %c0_1] : memref<128x128xbf16, #tpu.memory_space<vmem>>, vector<128x128xbf16>
    %c0_2 = arith.constant 0 : index
    %c0_3 = arith.constant 0 : index
    %4 = vector.load %arg4[%c0_2, %c0_3] : memref<8x128xf32, #tpu.memory_space<vmem>>, vector<8x128xf32>
    %c0_i32_4 = arith.constant 0 : i32
    %5 = arith.index_cast %c0_i32_4 : i32 to index
    %c0_5 = arith.constant 0 : index
    %c0_6 = arith.constant 0 : index
    %6 = vector.load %arg1[%5, %c0_5, %c0_6] : memref<8x8x128xf32, #tpu.memory_space<vmem>>, vector<1x8x128xf32>
    %7 = vector.shape_cast %6 : vector<1x8x128xf32> to vector<8x128xf32>
    %8 = arith.truncf %4 : vector<8x128xf32> to vector<8x128xbf16>
    %cst = arith.constant dense<0.000000e+00> : vector<8x128xf32>
    %9 = tpu.matmul %8, %3, %cst {dimension_numbers = #tpu.dot_dimension_numbers<[1], [0], [0], [1], [0, 0, 1, 1], [], []>} : vector<8x128xbf16>, vector<128x128xbf16>, vector<8x128xf32> -> vector<8x128xf32>
    %10 = arith.addf %7, %9 : vector<8x128xf32>
    %11 = math.tanh %10 : vector<8x128xf32>
    %12 = arith.index_cast %c0_i32_4 : i32 to index
    %c0_7 = arith.constant 0 : index
    %c0_8 = arith.constant 0 : index
    %13 = vector.load %arg3[%12, %c0_7, %c0_8] : memref<8x8x128xf32, #tpu.memory_space<vmem>>, vector<1x8x128xf32>
    %14 = vector.shape_cast %13 : vector<1x8x128xf32> to vector<8x128xf32>
    %15 = vector.shape_cast %11 : vector<8x128xf32> to vector<1x8x128xf32>
    tpu.vector_store %arg3[%12, %c0_7, %c0_8], %15 {strides = array<i32>} : memref<8x8x128xf32, #tpu.memory_space<vmem>>, vector<1x8x128xf32>,
    %c1_i32 = arith.constant 1 : i32
    %16 = arith.index_cast %c1_i32 : i32 to index
    %c0_9 = arith.constant 0 : index
    %c0_10 = arith.constant 0 : index
    %17 = vector.load %arg1[%16, %c0_9, %c0_10] : memref<8x8x128xf32, #tpu.memory_space<vmem>>, vector<1x8x128xf32>
    %18 = vector.shape_cast %17 : vector<1x8x128xf32> to vector<8x128xf32>
    %19 = arith.truncf %11 : vector<8x128xf32> to vector<8x128xbf16>
    %cst_11 = arith.constant dense<0.000000e+00> : vector<8x128xf32>
    %20 = tpu.matmul %19, %3, %cst_11 {dimension_numbers = #tpu.dot_dimension_numbers<[1], [0], [0], [1], [0, 0, 1, 1], [], []>} : vector<8x128xbf16>, vector<128x128xbf16>, vector<8x128xf32> -> vector<8x128xf32>
    %21 = arith.addf %18, %20 : vector<8x128xf32>
    %22 = math.tanh %21 : vector<8x128xf32>
    %23 = arith.index_cast %c1_i32 : i32 to index
    %c0_12 = arith.constant 0 : index
    %c0_13 = arith.constant 0 : index
    %24 = vector.load %arg3[%23, %c0_12, %c0_13] : memref<8x8x128xf32, #tpu.memory_space<vmem>>, vector<1x8x128xf32>
    %25 = vector.shape_cast %24 : vector<1x8x128xf32> to vector<8x128xf32>
    %26 = vector.shape_cast %22 : vector<8x128xf32> to vector<1x8x128xf32>
    tpu.vector_store %arg3[%23, %c0_12, %c0_13], %26 {strides = array<i32>} : memref<8x8x128xf32, #tpu.memory_space<vmem>>, vector<1x8x128xf32>,
    %c2_i32 = arith.constant 2 : i32
    %27 = arith.index_cast %c2_i32 : i32 to index
    %c0_14 = arith.constant 0 : index
    %c0_15 = arith.constant 0 : index
    %28 = vector.load %arg1[%27, %c0_14, %c0_15] : memref<8x8x128xf32, #tpu.memory_space<vmem>>, vector<1x8x128xf32>
    %29 = vector.shape_cast %28 : vector<1x8x128xf32> to vector<8x128xf32>
    %30 = arith.truncf %22 : vector<8x128xf32> to vector<8x128xbf16>
    %cst_16 = arith.constant dense<0.000000e+00> : vector<8x128xf32>
    %31 = tpu.matmul %30, %3, %cst_16 {dimension_numbers = #tpu.dot_dimension_numbers<[1], [0], [0], [1], [0, 0, 1, 1], [], []>} : vector<8x128xbf16>, vector<128x128xbf16>, vector<8x128xf32> -> vector<8x128xf32>
    %32 = arith.addf %29, %31 : vector<8x128xf32>
    %33 = math.tanh %32 : vector<8x128xf32>
    %34 = arith.index_cast %c2_i32 : i32 to index
    %c0_17 = arith.constant 0 : index
    %c0_18 = arith.constant 0 : index
    %35 = vector.load %arg3[%34, %c0_17, %c0_18] : memref<8x8x128xf32, #tpu.memory_space<vmem>>, vector<1x8x128xf32>
    %36 = vector.shape_cast %35 : vector<1x8x128xf32> to vector<8x128xf32>
    %37 = vector.shape_cast %33 : vector<8x128xf32> to vector<1x8x128xf32>
    tpu.vector_store %arg3[%34, %c0_17, %c0_18], %37 {strides = array<i32>} : memref<8x8x128xf32, #tpu.memory_space<vmem>>, vector<1x8x128xf32>,
    %c3_i32 = arith.constant 3 : i32
    %38 = arith.index_cast %c3_i32 : i32 to index
    %c0_19 = arith.constant 0 : index
    %c0_20 = arith.constant 0 : index
    %39 = vector.load %arg1[%38, %c0_19, %c0_20] : memref<8x8x128xf32, #tpu.memory_space<vmem>>, vector<1x8x128xf32>
    %40 = vector.shape_cast %39 : vector<1x8x128xf32> to vector<8x128xf32>
    %41 = arith.truncf %33 : vector<8x128xf32> to vector<8x128xbf16>
    %cst_21 = arith.constant dense<0.000000e+00> : vector<8x128xf32>
    %42 = tpu.matmul %41, %3, %cst_21 {dimension_numbers = #tpu.dot_dimension_numbers<[1], [0], [0], [1], [0, 0, 1, 1], [], []>} : vector<8x128xbf16>, vector<128x128xbf16>, vector<8x128xf32> -> vector<8x128xf32>
    %43 = arith.addf %40, %42 : vector<8x128xf32>
    %44 = math.tanh %43 : vector<8x128xf32>
    %45 = arith.index_cast %c3_i32 : i32 to index
    %c0_22 = arith.constant 0 : index
    %c0_23 = arith.constant 0 : index
    %46 = vector.load %arg3[%45, %c0_22, %c0_23] : memref<8x8x128xf32, #tpu.memory_space<vmem>>, vector<1x8x128xf32>
    %47 = vector.shape_cast %46 : vector<1x8x128xf32> to vector<8x128xf32>
    %48 = vector.shape_cast %44 : vector<8x128xf32> to vector<1x8x128xf32>
    tpu.vector_store %arg3[%45, %c0_22, %c0_23], %48 {strides = array<i32>} : memref<8x8x128xf32, #tpu.memory_space<vmem>>, vector<1x8x128xf32>,
    %c4_i32 = arith.constant 4 : i32
    %49 = arith.index_cast %c4_i32 : i32 to index
    %c0_24 = arith.constant 0 : index
    %c0_25 = arith.constant 0 : index
    %50 = vector.load %arg1[%49, %c0_24, %c0_25] : memref<8x8x128xf32, #tpu.memory_space<vmem>>, vector<1x8x128xf32>
    %51 = vector.shape_cast %50 : vector<1x8x128xf32> to vector<8x128xf32>
    %52 = arith.truncf %44 : vector<8x128xf32> to vector<8x128xbf16>
    %cst_26 = arith.constant dense<0.000000e+00> : vector<8x128xf32>
    %53 = tpu.matmul %52, %3, %cst_26 {dimension_numbers = #tpu.dot_dimension_numbers<[1], [0], [0], [1], [0, 0, 1, 1], [], []>} : vector<8x128xbf16>, vector<128x128xbf16>, vector<8x128xf32> -> vector<8x128xf32>
    %54 = arith.addf %51, %53 : vector<8x128xf32>
    %55 = math.tanh %54 : vector<8x128xf32>
    %56 = arith.index_cast %c4_i32 : i32 to index
    %c0_27 = arith.constant 0 : index
    %c0_28 = arith.constant 0 : index
    %57 = vector.load %arg3[%56, %c0_27, %c0_28] : memref<8x8x128xf32, #tpu.memory_space<vmem>>, vector<1x8x128xf32>
    %58 = vector.shape_cast %57 : vector<1x8x128xf32> to vector<8x128xf32>
    %59 = vector.shape_cast %55 : vector<8x128xf32> to vector<1x8x128xf32>
    tpu.vector_store %arg3[%56, %c0_27, %c0_28], %59 {strides = array<i32>} : memref<8x8x128xf32, #tpu.memory_space<vmem>>, vector<1x8x128xf32>,
    %c5_i32 = arith.constant 5 : i32
    %60 = arith.index_cast %c5_i32 : i32 to index
    %c0_29 = arith.constant 0 : index
    %c0_30 = arith.constant 0 : index
    %61 = vector.load %arg1[%60, %c0_29, %c0_30] : memref<8x8x128xf32, #tpu.memory_space<vmem>>, vector<1x8x128xf32>
    %62 = vector.shape_cast %61 : vector<1x8x128xf32> to vector<8x128xf32>
    %63 = arith.truncf %55 : vector<8x128xf32> to vector<8x128xbf16>
    %cst_31 = arith.constant dense<0.000000e+00> : vector<8x128xf32>
    %64 = tpu.matmul %63, %3, %cst_31 {dimension_numbers = #tpu.dot_dimension_numbers<[1], [0], [0], [1], [0, 0, 1, 1], [], []>} : vector<8x128xbf16>, vector<128x128xbf16>, vector<8x128xf32> -> vector<8x128xf32>
    %65 = arith.addf %62, %64 : vector<8x128xf32>
    %66 = math.tanh %65 : vector<8x128xf32>
    %67 = arith.index_cast %c5_i32 : i32 to index
    %c0_32 = arith.constant 0 : index
    %c0_33 = arith.constant 0 : index
    %68 = vector.load %arg3[%67, %c0_32, %c0_33] : memref<8x8x128xf32, #tpu.memory_space<vmem>>, vector<1x8x128xf32>
    %69 = vector.shape_cast %68 : vector<1x8x128xf32> to vector<8x128xf32>
    %70 = vector.shape_cast %66 : vector<8x128xf32> to vector<1x8x128xf32>
    tpu.vector_store %arg3[%67, %c0_32, %c0_33], %70 {strides = array<i32>} : memref<8x8x128xf32, #tpu.memory_space<vmem>>, vector<1x8x128xf32>,
    %c6_i32 = arith.constant 6 : i32
    %71 = arith.index_cast %c6_i32 : i32 to index
    %c0_34 = arith.constant 0 : index
    %c0_35 = arith.constant 0 : index
    %72 = vector.load %arg1[%71, %c0_34, %c0_35] : memref<8x8x128xf32, #tpu.memory_space<vmem>>, vector<1x8x128xf32>
    %73 = vector.shape_cast %72 : vector<1x8x128xf32> to vector<8x128xf32>
    %74 = arith.truncf %66 : vector<8x128xf32> to vector<8x128xbf16>
    %cst_36 = arith.constant dense<0.000000e+00> : vector<8x128xf32>
    %75 = tpu.matmul %74, %3, %cst_36 {dimension_numbers = #tpu.dot_dimension_numbers<[1], [0], [0], [1], [0, 0, 1, 1], [], []>} : vector<8x128xbf16>, vector<128x128xbf16>, vector<8x128xf32> -> vector<8x128xf32>
    %76 = arith.addf %73, %75 : vector<8x128xf32>
    %77 = math.tanh %76 : vector<8x128xf32>
    %78 = arith.index_cast %c6_i32 : i32 to index
    %c0_37 = arith.constant 0 : index
    %c0_38 = arith.constant 0 : index
    %79 = vector.load %arg3[%78, %c0_37, %c0_38] : memref<8x8x128xf32, #tpu.memory_space<vmem>>, vector<1x8x128xf32>
    %80 = vector.shape_cast %79 : vector<1x8x128xf32> to vector<8x128xf32>
    %81 = vector.shape_cast %77 : vector<8x128xf32> to vector<1x8x128xf32>
    tpu.vector_store %arg3[%78, %c0_37, %c0_38], %81 {strides = array<i32>} : memref<8x8x128xf32, #tpu.memory_space<vmem>>, vector<1x8x128xf32>,
    %c7_i32 = arith.constant 7 : i32
    %82 = arith.index_cast %c7_i32 : i32 to index
    %c0_39 = arith.constant 0 : index
    %c0_40 = arith.constant 0 : index
    %83 = vector.load %arg1[%82, %c0_39, %c0_40] : memref<8x8x128xf32, #tpu.memory_space<vmem>>, vector<1x8x128xf32>
    %84 = vector.shape_cast %83 : vector<1x8x128xf32> to vector<8x128xf32>
    %85 = arith.truncf %77 : vector<8x128xf32> to vector<8x128xbf16>
    %cst_41 = arith.constant dense<0.000000e+00> : vector<8x128xf32>
    %86 = tpu.matmul %85, %3, %cst_41 {dimension_numbers = #tpu.dot_dimension_numbers<[1], [0], [0], [1], [0, 0, 1, 1], [], []>} : vector<8x128xbf16>, vector<128x128xbf16>, vector<8x128xf32> -> vector<8x128xf32>
    %87 = arith.addf %84, %86 : vector<8x128xf32>
    %88 = math.tanh %87 : vector<8x128xf32>
    %89 = arith.index_cast %c7_i32 : i32 to index
    %c0_42 = arith.constant 0 : index
    %c0_43 = arith.constant 0 : index
    %90 = vector.load %arg3[%89, %c0_42, %c0_43] : memref<8x8x128xf32, #tpu.memory_space<vmem>>, vector<1x8x128xf32>
    %91 = vector.shape_cast %90 : vector<1x8x128xf32> to vector<8x128xf32>
    %92 = vector.shape_cast %88 : vector<8x128xf32> to vector<1x8x128xf32>
    tpu.vector_store %arg3[%89, %c0_42, %c0_43], %92 {strides = array<i32>} : memref<8x8x128xf32, #tpu.memory_space<vmem>>, vector<1x8x128xf32>,
    %c8_i32 = arith.constant 8 : i32
    %c0_44 = arith.constant 0 : index
    %c0_45 = arith.constant 0 : index
    %93 = vector.load %arg4[%c0_44, %c0_45] : memref<8x128xf32, #tpu.memory_space<vmem>>, vector<8x128xf32>
    tpu.vector_store %arg4[%c0_44, %c0_45], %88 {strides = array<i32>} : memref<8x128xf32, #tpu.memory_space<vmem>>, vector<8x128xf32>,
    return
  }
  func.func @transform_0(%arg0: i32) -> (i32, i32, i32) {
    %c0_i32 = arith.constant 0 : i32
    %c0_i32_0 = arith.constant 0 : i32
    %c0_i32_1 = arith.constant 0 : i32
    return %arg0, %c0_i32, %c0_i32_0 : i32, i32, i32
  }
  func.func @transform_2(%arg0: i32) -> (i32, i32, i32) {
    %c0_i32 = arith.constant 0 : i32
    %c0_i32_0 = arith.constant 0 : i32
    %c0_i32_1 = arith.constant 0 : i32
    return %arg0, %c0_i32, %c0_i32_0 : i32, i32, i32
  }
}

module attributes {stable_mosaic.version = 11 : i64} {
  func.func @_matmul_bias_kernel(%arg0: i32, %arg1: i32, %arg2: i32, %arg3: memref<64x128xf32, #tpu.memory_space<vmem>>, %arg4: memref<128x128xbf16, #tpu.memory_space<vmem>>, %arg5: memref<1x128xf32, #tpu.memory_space<vmem>>, %arg6: memref<64x128xf32, #tpu.memory_space<vmem>>, %arg7: memref<64x128xf32, #tpu.memory_space<vmem>>) attributes {dimension_semantics = [#tpu.dimension_semantics<parallel>, #tpu.dimension_semantics<parallel>, #tpu.dimension_semantics<arbitrary>], iteration_bounds = array<i64: 1, 1, 1>, scalar_prefetch = 0 : i64, scratch_operands = 1 : i64, tpu.core_type = #tpu.core_type<tc>, window_params = [{transform_indices = @transform_0, window_bounds = array<i64: 64, 128>}, {transform_indices = @transform_1, window_bounds = array<i64: 128, 128>}, {transform_indices = @transform_2, window_bounds = array<i64: 1, 128>}, {transform_indices = @transform_3, window_bounds = array<i64: 64, 128>}]} {
    %c0_i32 = arith.constant 0 : i32
    %0 = arith.cmpi eq, %arg2, %c0_i32 : i32
    %1 = arith.extui %0 : i1 to i32
    %c0_i32_0 = arith.constant 0 : i32
    %2 = arith.cmpi ne, %1, %c0_i32_0 : i32
    scf.if %2 {
      %cst_10 = arith.constant 0.000000e+00 : f32
      %13 = vector.broadcast %cst_10 : f32 to vector<64x128xf32>
      %c0_11 = arith.constant 0 : index
      %c0_12 = arith.constant 0 : index
      %14 = vector.load %arg7[%c0_11, %c0_12] : memref<64x128xf32, #tpu.memory_space<vmem>>, vector<64x128xf32>
      tpu.vector_store %arg7[%c0_11, %c0_12], %13 {strides = array<i32>} : memref<64x128xf32, #tpu.memory_space<vmem>>, vector<64x128xf32>,
    } else {
    }
    %c0 = arith.constant 0 : index
    %c0_1 = arith.constant 0 : index
    %3 = vector.load %arg7[%c0, %c0_1] : memref<64x128xf32, #tpu.memory_space<vmem>>, vector<64x128xf32>
    %c0_2 = arith.constant 0 : index
    %c0_3 = arith.constant 0 : index
    %4 = vector.load %arg3[%c0_2, %c0_3] : memref<64x128xf32, #tpu.memory_space<vmem>>, vector<64x128xf32>
    %5 = arith.truncf %4 : vector<64x128xf32> to vector<64x128xbf16>
    %c0_4 = arith.constant 0 : index
    %c0_5 = arith.constant 0 : index
    %6 = vector.load %arg4[%c0_4, %c0_5] : memref<128x128xbf16, #tpu.memory_space<vmem>>, vector<128x128xbf16>
    %cst = arith.constant dense<0.000000e+00> : vector<64x128xf32>
    %7 = tpu.matmul %5, %6, %cst {dimension_numbers = #tpu.dot_dimension_numbers<[1], [0], [0], [1], [0, 0, 1, 1], [], []>} : vector<64x128xbf16>, vector<128x128xbf16>, vector<64x128xf32> -> vector<64x128xf32>
    %8 = arith.addf %3, %7 : vector<64x128xf32>
    %c0_6 = arith.constant 0 : index
    %c0_7 = arith.constant 0 : index
    %9 = vector.load %arg7[%c0_6, %c0_7] : memref<64x128xf32, #tpu.memory_space<vmem>>, vector<64x128xf32>
    tpu.vector_store %arg7[%c0_6, %c0_7], %8 {strides = array<i32>} : memref<64x128xf32, #tpu.memory_space<vmem>>, vector<64x128xf32>,
    %c0_i32_8 = arith.constant 0 : i32
    %10 = arith.cmpi eq, %arg2, %c0_i32_8 : i32
    %11 = arith.extui %10 : i1 to i32
    %c0_i32_9 = arith.constant 0 : i32
    %12 = arith.cmpi ne, %11, %c0_i32_9 : i32
    scf.if %12 {
      %c0_10 = arith.constant 0 : index
      %c0_11 = arith.constant 0 : index
      %13 = vector.load %arg7[%c0_10, %c0_11] : memref<64x128xf32, #tpu.memory_space<vmem>>, vector<64x128xf32>
      %c0_12 = arith.constant 0 : index
      %c0_13 = arith.constant 0 : index
      %14 = vector.load %arg5[%c0_12, %c0_13] : memref<1x128xf32, #tpu.memory_space<vmem>>, vector<1x128xf32>
      %15 = vector.broadcast %14 : vector<1x128xf32> to vector<64x128xf32>
      %16 = arith.addf %13, %15 : vector<64x128xf32>
      %c0_14 = arith.constant 0 : index
      %c0_15 = arith.constant 0 : index
      %17 = vector.load %arg6[%c0_14, %c0_15] : memref<64x128xf32, #tpu.memory_space<vmem>>, vector<64x128xf32>
      tpu.vector_store %arg6[%c0_14, %c0_15], %16 {strides = array<i32>} : memref<64x128xf32, #tpu.memory_space<vmem>>, vector<64x128xf32>,
    } else {
    }
    return
  }
  func.func @transform_0(%arg0: i32, %arg1: i32, %arg2: i32) -> (i32, i32) {
    %c0_i32 = arith.constant 0 : i32
    return %arg0, %arg2 : i32, i32
  }
  func.func @transform_1(%arg0: i32, %arg1: i32, %arg2: i32) -> (i32, i32) {
    %c0_i32 = arith.constant 0 : i32
    return %arg2, %arg1 : i32, i32
  }
  func.func @transform_2(%arg0: i32, %arg1: i32, %arg2: i32) -> (i32, i32) {
    %c0_i32 = arith.constant 0 : i32
    %c0_i32_0 = arith.constant 0 : i32
    return %c0_i32, %arg1 : i32, i32
  }
  func.func @transform_3(%arg0: i32, %arg1: i32, %arg2: i32) -> (i32, i32) {
    %c0_i32 = arith.constant 0 : i32
    return %arg0, %arg1 : i32, i32
  }
}

module attributes {stable_mosaic.version = 11 : i64} {
  func.func @_matmul_bias_kernel(%arg0: i32, %arg1: i32, %arg2: i32, %arg3: memref<64x128xf32, #tpu.memory_space<vmem>>, %arg4: memref<128x128xbf16, #tpu.memory_space<vmem>>, %arg5: memref<1x128xf32, #tpu.memory_space<vmem>>, %arg6: memref<64x128xf32, #tpu.memory_space<vmem>>, %arg7: memref<64x128xf32, #tpu.memory_space<vmem>>) attributes {dimension_semantics = [#tpu.dimension_semantics<parallel>, #tpu.dimension_semantics<parallel>, #tpu.dimension_semantics<arbitrary>], iteration_bounds = array<i64: 1, 1, 1>, scalar_prefetch = 0 : i64, scratch_operands = 1 : i64, tpu.core_type = #tpu.core_type<tc>, window_params = [{transform_indices = @transform_0, window_bounds = array<i64: 64, 128>}, {transform_indices = @transform_1, window_bounds = array<i64: 128, 128>}, {transform_indices = @transform_2, window_bounds = array<i64: 1, 128>}, {transform_indices = @transform_3, window_bounds = array<i64: 64, 128>}]} {
    %c0_i32 = arith.constant 0 : i32
    %0 = arith.cmpi eq, %arg2, %c0_i32 : i32
    %1 = arith.extui %0 : i1 to i32
    %c0_i32_0 = arith.constant 0 : i32
    %2 = arith.cmpi ne, %1, %c0_i32_0 : i32
    scf.if %2 {
      %cst_10 = arith.constant 0.000000e+00 : f32
      %13 = vector.broadcast %cst_10 : f32 to vector<64x128xf32>
      %c0_11 = arith.constant 0 : index
      %c0_12 = arith.constant 0 : index
      %14 = vector.load %arg7[%c0_11, %c0_12] : memref<64x128xf32, #tpu.memory_space<vmem>>, vector<64x128xf32>
      tpu.vector_store %arg7[%c0_11, %c0_12], %13 {strides = array<i32>} : memref<64x128xf32, #tpu.memory_space<vmem>>, vector<64x128xf32>,
    } else {
    }
    %c0 = arith.constant 0 : index
    %c0_1 = arith.constant 0 : index
    %3 = vector.load %arg7[%c0, %c0_1] : memref<64x128xf32, #tpu.memory_space<vmem>>, vector<64x128xf32>
    %c0_2 = arith.constant 0 : index
    %c0_3 = arith.constant 0 : index
    %4 = vector.load %arg3[%c0_2, %c0_3] : memref<64x128xf32, #tpu.memory_space<vmem>>, vector<64x128xf32>
    %5 = arith.truncf %4 : vector<64x128xf32> to vector<64x128xbf16>
    %c0_4 = arith.constant 0 : index
    %c0_5 = arith.constant 0 : index
    %6 = vector.load %arg4[%c0_4, %c0_5] : memref<128x128xbf16, #tpu.memory_space<vmem>>, vector<128x128xbf16>
    %cst = arith.constant dense<0.000000e+00> : vector<64x128xf32>
    %7 = tpu.matmul %5, %6, %cst {dimension_numbers = #tpu.dot_dimension_numbers<[1], [0], [0], [1], [0, 0, 1, 1], [], []>} : vector<64x128xbf16>, vector<128x128xbf16>, vector<64x128xf32> -> vector<64x128xf32>
    %8 = arith.addf %3, %7 : vector<64x128xf32>
    %c0_6 = arith.constant 0 : index
    %c0_7 = arith.constant 0 : index
    %9 = vector.load %arg7[%c0_6, %c0_7] : memref<64x128xf32, #tpu.memory_space<vmem>>, vector<64x128xf32>
    tpu.vector_store %arg7[%c0_6, %c0_7], %8 {strides = array<i32>} : memref<64x128xf32, #tpu.memory_space<vmem>>, vector<64x128xf32>,
    %c0_i32_8 = arith.constant 0 : i32
    %10 = arith.cmpi eq, %arg2, %c0_i32_8 : i32
    %11 = arith.extui %10 : i1 to i32
    %c0_i32_9 = arith.constant 0 : i32
    %12 = arith.cmpi ne, %11, %c0_i32_9 : i32
    scf.if %12 {
      %c0_10 = arith.constant 0 : index
      %c0_11 = arith.constant 0 : index
      %13 = vector.load %arg7[%c0_10, %c0_11] : memref<64x128xf32, #tpu.memory_space<vmem>>, vector<64x128xf32>
      %c0_12 = arith.constant 0 : index
      %c0_13 = arith.constant 0 : index
      %14 = vector.load %arg5[%c0_12, %c0_13] : memref<1x128xf32, #tpu.memory_space<vmem>>, vector<1x128xf32>
      %15 = vector.broadcast %14 : vector<1x128xf32> to vector<64x128xf32>
      %16 = arith.addf %13, %15 : vector<64x128xf32>
      %cst_14 = arith.constant 0.000000e+00 : f32
      %17 = vector.broadcast %cst_14 : f32 to vector<64x128xf32>
      %18 = arith.maximumf %16, %17 : vector<64x128xf32>
      %c0_15 = arith.constant 0 : index
      %c0_16 = arith.constant 0 : index
      %19 = vector.load %arg6[%c0_15, %c0_16] : memref<64x128xf32, #tpu.memory_space<vmem>>, vector<64x128xf32>
      tpu.vector_store %arg6[%c0_15, %c0_16], %18 {strides = array<i32>} : memref<64x128xf32, #tpu.memory_space<vmem>>, vector<64x128xf32>,
    } else {
    }
    return
  }
  func.func @transform_0(%arg0: i32, %arg1: i32, %arg2: i32) -> (i32, i32) {
    %c0_i32 = arith.constant 0 : i32
    return %arg0, %arg2 : i32, i32
  }
  func.func @transform_1(%arg0: i32, %arg1: i32, %arg2: i32) -> (i32, i32) {
    %c0_i32 = arith.constant 0 : i32
    return %arg2, %arg1 : i32, i32
  }
  func.func @transform_2(%arg0: i32, %arg1: i32, %arg2: i32) -> (i32, i32) {
    %c0_i32 = arith.constant 0 : i32
    %c0_i32_0 = arith.constant 0 : i32
    return %c0_i32, %arg1 : i32, i32
  }
  func.func @transform_3(%arg0: i32, %arg1: i32, %arg2: i32) -> (i32, i32) {
    %c0_i32 = arith.constant 0 : i32
    return %arg0, %arg1 : i32, i32
  }
}

</mosaic_0001>

<llo_original>
// kernel: midi_rnn_forward.8
$region0: #{midi_rnn_forward.8}
  #allocation0 [shape = 'u32[]', space=smem, size = 0x4, offset = 0x4, fixed_abs, tag = 'smem constant byte address 0x4 - core index']
  #allocation1 [shape = 'u32[72,128]{1,0:T(1,128)}', space=vmem, size = 0x9000, scoped, tag = 'internal scratch']
  #allocation2 [shape = 'f32[64,128]{1,0:T(8,128)}', space=vmem, size = 0x8000, scoped, tag = 'scratch operand']
  %s0 = inlined_call_operand.vmem [shape: f32[64,128], index: 0, kind: input, shape index: {}]
  %s1 = inlined_call_operand.hbm [shape: bf16[128,128], index: 1, kind: input, shape index: {}]
  %s2 = inlined_call_operand.vmem [shape: f32[1,128], index: 2, kind: input, shape index: {}]
  %s3 = inlined_call_operand.vmem [shape: f32[64,128], index: 3, kind: output, shape index: {}]
  %s4 = sld [smem:[#allocation0]]
  $region34: #{midi_rnn_forward.8} parent=0
    _
  %s6 = ssub.s32 1, %s4
  %s7 = scalar_select 0, %s6, %s4
  $region1: #{midi_rnn_forward.8} parent=0
    #allocation3 [shape = 'u8[32768]{0}', space=vmem, size = 0x8000, scoped, tag = 'input window, operand 1, single buffered']
    #allocation4 [shape = 's32[1]{0}', space=sflag, size = 0x4, scoped, tag = 'scoped memory for midi_rnn_forward.8']
    %8 = vsyncpa [#allocation4], 0
    // Predicated region
    $region2: #{midi_rnn_forward.8} parent=1 // pred_check
      _
    $region3: #{midi_rnn_forward.8} parent=1 // pred_check_branch
      %10 = sbr.rel (0) target = $region5
    $region4: #{midi_rnn_forward.8} parent=1 // pred_region
      _
    $region5: #{midi_rnn_forward.8} parent=1 // pred_fallthru
      _
    // Predicated region
    $region6: #{midi_rnn_forward.8} parent=1 // pred_check
      _
    $region7: #{midi_rnn_forward.8} parent=1 // pred_check_branch
      %12 = sbr.rel (0) target = $region9
    $region8: #{midi_rnn_forward.8} parent=1 // pred_region
      %14 = vsyncadd [#allocation4], 0
      %s15 = sshll.u32 %s1, 4
      %s16 = int_to_ptr.hbm [resolvable:$true] %s15
      %s17 = sshll.u32 [#allocation3], 4
      %s18 = int_to_ptr.vmem [resolvable:$true] %s17
      %23 = dma.hbm_to_vmem [thread:$0]  %s16, 1024, %s18, [#allocation4], 64, 64, 4
    $region9: #{midi_rnn_forward.8} parent=1 // pred_fallthru
      _
    // Predicated region
    $region10: #{midi_rnn_forward.8} parent=1 // pred_check
      _
    $region11: #{midi_rnn_forward.8} parent=1 // pred_check_branch
      %25 = sbr.rel (0) target = $region13
    $region12: #{midi_rnn_forward.8} parent=1 // pred_region
      _
    $region13: #{midi_rnn_forward.8} parent=1 // pred_fallthru
      _
    // Predicated region
    $region14: #{midi_rnn_forward.8} parent=1 // pred_check
      _
    $region15: #{midi_rnn_forward.8} parent=1 // pred_check_branch
      %27 = sbr.rel (0) target = $region17
    $region16: #{midi_rnn_forward.8} parent=1 // pred_region
      %29 = dma.done [#allocation4], 1024
    $region17: #{midi_rnn_forward.8} parent=1 // pred_fallthru
      _
    %p30 = scmp.eq.s32.totalorder 0, 0
    // Predicated region
    $region18: #{midi_rnn_forward.8} parent=1 // pred_check
      %p31 = pneg %p30
    $region19: #{midi_rnn_forward.8} parent=1 // pred_check_branch
      %33 = sbr.rel (%p31) target = $region21
    $region20: #{midi_rnn_forward.8} parent=1 // pred_region
      %34 = vst [vmem:[#allocation2] sm:$0xff] 0.0
      %35 = vst [vmem:[#allocation2 + $0x8] sm:$0xff] 0.0
      %36 = vst [vmem:[#allocation2 + $0x10] sm:$0xff] 0.0
      %37 = vst [vmem:[#allocation2 + $0x18] sm:$0xff] 0.0
      %38 = vst [vmem:[#allocation2 + $0x20] sm:$0xff] 0.0
      %39 = vst [vmem:[#allocation2 + $0x28] sm:$0xff] 0.0
      %40 = vst [vmem:[#allocation2 + $0x30] sm:$0xff] 0.0
      %41 = vst [vmem:[#allocation2 + $0x38] sm:$0xff] 0.0
    $region21: #{midi_rnn_forward.8} parent=1 // pred_fallthru
      _
    %v42 = vld [vmem:[#allocation2] sm:$0xff]
    %v43 = vld [vmem:[#allocation2 + $0x8] sm:$0xff]
    %v44 = vld [vmem:[#allocation2 + $0x10] sm:$0xff]
    %v45 = vld [vmem:[#allocation2 + $0x18] sm:$0xff]
    %v46 = vld [vmem:[#allocation2 + $0x20] sm:$0xff]
    %v47 = vld [vmem:[#allocation2 + $0x28] sm:$0xff]
    %v48 = vld [vmem:[#allocation2 + $0x30] sm:$0xff]
    %v49 = vld [vmem:[#allocation2 + $0x38] sm:$0xff]
    %v50 = vld [vmem:[%s0] sm:$0xff]
    %v51 = vld [vmem:[%s0 + $0x8] sm:$0xff]
    %v52 = vld [vmem:[%s0 + $0x10] sm:$0xff]
    %v53 = vld [vmem:[%s0 + $0x18] sm:$0xff]
    %v54 = vld [vmem:[%s0 + $0x20] sm:$0xff]
    %v55 = vld [vmem:[%s0 + $0x28] sm:$0xff]
    %v56 = vld [vmem:[%s0 + $0x30] sm:$0xff]
    %v57 = vld [vmem:[%s0 + $0x38] sm:$0xff]
    %v58 = vpack.c.bf16 %v51, %v50
    %v59 = vpack.c.bf16 %v53, %v52
    %v60 = vpack.c.bf16 %v55, %v54
    %v61 = vpack.c.bf16 %v57, %v56
    %v62 = vld [vmem:[#allocation3] sm:$0xf]
    %v63 = vld [vmem:[#allocation3 + $0x4] sm:$0xf]
    %v64 = vld [vmem:[#allocation3 + $0x8] sm:$0xf]
    %v65 = vld [vmem:[#allocation3 + $0xc] sm:$0xf]
    %v66 = vld [vmem:[#allocation3 + $0x10] sm:$0xf]
    %v67 = vld [vmem:[#allocation3 + $0x14] sm:$0xf]
    %v68 = vld [vmem:[#allocation3 + $0x18] sm:$0xf]
    %v69 = vld [vmem:[#allocation3 + $0x1c] sm:$0xf]
    %v70 = vld [vmem:[#allocation3 + $0x20] sm:$0xf]
    %v71 = vld [vmem:[#allocation3 + $0x24] sm:$0xf]
    %v72 = vld [vmem:[#allocation3 + $0x28] sm:$0xf]
    %v73 = vld [vmem:[#allocation3 + $0x2c] sm:$0xf]
    %v74 = vld [vmem:[#allocation3 + $0x30] sm:$0xf]
    %v75 = vld [vmem:[#allocation3 + $0x34] sm:$0xf]
    %v76 = vld [vmem:[#allocation3 + $0x38] sm:$0xf]
    %v77 = vld [vmem:[#allocation3 + $0x3c] sm:$0xf]
    %v94 = vunpack.c.l.b16 %v62
    %v95 = vunpack.c.l.b16 %v63
    %v96 = vunpack.c.l.b16 %v64
    %v97 = vunpack.c.l.b16 %v65
    %v98 = vunpack.c.l.b16 %v66
    %v99 = vunpack.c.l.b16 %v67
    %v100 = vunpack.c.l.b16 %v68
    %v101 = vunpack.c.l.b16 %v69
    %v102 = vunpack.c.l.b16 %v70
    %v103 = vunpack.c.l.b16 %v71
    %v104 = vunpack.c.l.b16 %v72
    %v105 = vunpack.c.l.b16 %v73
    %v106 = vunpack.c.l.b16 %v74
    %v107 = vunpack.c.l.b16 %v75
    %v108 = vunpack.c.l.b16 %v76
    %v109 = vunpack.c.l.b16 %v77
    %v110 = vpack.c.b16 %v95, %v94
    %v111 = vpack.c.b16 %v97, %v96
    %v112 = vpack.c.b16 %v99, %v98
    %v113 = vpack.c.b16 %v101, %v100
    %v114 = vpack.c.b16 %v103, %v102
    %v115 = vpack.c.b16 %v105, %v104
    %v116 = vpack.c.b16 %v107, %v106
    %v117 = vpack.c.b16 %v109, %v108
    %126 = vmatpush.bf16.msra.mxu0 %v117
    %127 = vmatpush.bf16.msra.mxu0 %v116
    %128 = vmatpush.bf16.msra.mxu0 %v115
    %129 = vmatpush.bf16.msra.mxu0 %v114
    %130 = vmatpush.bf16.msra.mxu0 %v113
    %131 = vmatpush.bf16.msra.mxu0 %v112
    %132 = vmatpush.bf16.msra.mxu0 %v111
    %133 = vmatpush.bf16.msra.mxu0 %v110
    %134 = vmatmul.bf16.gmra.mxu0 %v58
    %v135 = vpop.f32.mrf.mxu0
    %v136 = vadd.f32 0.0, %v135
    %v137 = vpop.f32.mrf.mxu0
    %v138 = vadd.f32 0.0, %v137
    %139 = vmatmul.bf16.gmra.mxu0 %v59
    %v140 = vpop.f32.mrf.mxu0
    %v141 = vadd.f32 0.0, %v140
    %v142 = vpop.f32.mrf.mxu0
    %v143 = vadd.f32 0.0, %v142
    %144 = vmatmul.bf16.gmra.mxu0 %v60
    %v145 = vpop.f32.mrf.mxu0
    %v146 = vadd.f32 0.0, %v145
    %v147 = vpop.f32.mrf.mxu0
    %v148 = vadd.f32 0.0, %v147
    %149 = vmatmul.bf16.gmra.mxu0 %v61
    %v150 = vpop.f32.mrf.mxu0
    %v151 = vadd.f32 0.0, %v150
    %v152 = vpop.f32.mrf.mxu0
    %v153 = vadd.f32 0.0, %v152
    %154 = vdwg.mxu0
    %v155 = vadd.f32 %v42, %v136
    %v156 = vadd.f32 %v43, %v138
    %v157 = vadd.f32 %v44, %v141
    %v158 = vadd.f32 %v45, %v143
    %v159 = vadd.f32 %v46, %v146
    %v160 = vadd.f32 %v47, %v148
    %v161 = vadd.f32 %v48, %v151
    %v162 = vadd.f32 %v49, %v153
    %163 = vst [vmem:[#allocation2] sm:$0xff] %v155
    %164 = vst [vmem:[#allocation2 + $0x8] sm:$0xff] %v156
    %165 = vst [vmem:[#allocation2 + $0x10] sm:$0xff] %v157
    %166 = vst [vmem:[#allocation2 + $0x18] sm:$0xff] %v158
    %167 = vst [vmem:[#allocation2 + $0x20] sm:$0xff] %v159
    %168 = vst [vmem:[#allocation2 + $0x28] sm:$0xff] %v160
    %169 = vst [vmem:[#allocation2 + $0x30] sm:$0xff] %v161
    %170 = vst [vmem:[#allocation2 + $0x38] sm:$0xff] %v162
    // Predicated region
    $region22: #{midi_rnn_forward.8} parent=1 // pred_check
      %p171 = pneg %p30
    $region23: #{midi_rnn_forward.8} parent=1 // pred_check_branch
      %173 = sbr.rel (%p171) target = $region25
    $region24: #{midi_rnn_forward.8} parent=1 // pred_region
      %v174 = vld [vmem:[#allocation2] sm:$0xff]
      %v175 = vld [vmem:[#allocation2 + $0x8] sm:$0xff]
      %v176 = vld [vmem:[#allocation2 + $0x10] sm:$0xff]
      %v177 = vld [vmem:[#allocation2 + $0x18] sm:$0xff]
      %v178 = vld [vmem:[#allocation2 + $0x20] sm:$0xff]
      %v179 = vld [vmem:[#allocation2 + $0x28] sm:$0xff]
      %v180 = vld [vmem:[#allocation2 + $0x30] sm:$0xff]
      %v181 = vld [vmem:[#allocation2 + $0x38] sm:$0xff]
      %v182 = vld [vmem:[%s2] sm:$0x1]
      %v184 = vperm.slane %v182, 0
      %v186 = vadd.f32 %v174, %v184
      %v187 = vadd.f32 %v175, %v184
      %v188 = vadd.f32 %v176, %v184
      %v189 = vadd.f32 %v177, %v184
      %v190 = vadd.f32 %v178, %v184
      %v191 = vadd.f32 %v179, %v184
      %v192 = vadd.f32 %v180, %v184
      %v193 = vadd.f32 %v181, %v184
      %194 = vst [vmem:[%s3] sm:$0xff] %v186
      %195 = vst [vmem:[%s3 + $0x8] sm:$0xff] %v187
      %196 = vst [vmem:[%s3 + $0x10] sm:$0xff] %v188
      %197 = vst [vmem:[%s3 + $0x18] sm:$0xff] %v189
      %198 = vst [vmem:[%s3 + $0x20] sm:$0xff] %v190
      %199 = vst [vmem:[%s3 + $0x28] sm:$0xff] %v191
      %200 = vst [vmem:[%s3 + $0x30] sm:$0xff] %v192
      %201 = vst [vmem:[%s3 + $0x38] sm:$0xff] %v193
    $region25: #{midi_rnn_forward.8} parent=1 // pred_fallthru
      _
    // Predicated region
    $region26: #{midi_rnn_forward.8} parent=1 // pred_check
      _
    $region27: #{midi_rnn_forward.8} parent=1 // pred_check_branch
      %203 = sbr.rel (0) target = $region29
    $region28: #{midi_rnn_forward.8} parent=1 // pred_region
      _
    $region29: #{midi_rnn_forward.8} parent=1 // pred_fallthru
      _
    // Predicated region
    $region30: #{midi_rnn_forward.8} parent=1 // pred_check
      _
    $region31: #{midi_rnn_forward.8} parent=1 // pred_check_branch
      %205 = sbr.rel (0) target = $region33
    $region32: #{midi_rnn_forward.8} parent=1 // pred_region
      _
    $region33: #{midi_rnn_forward.8} parent=1 // pred_fallthru
      _
    %206 = vsyncpa [#allocation4], 1

// kernel: midi_rnn_forward.6
$region0: #{midi_rnn_forward.6}
  #allocation0 [shape = 'u32[]', space=smem, size = 0x4, offset = 0x4, fixed_abs, tag = 'smem constant byte address 0x4 - core index']
  #allocation1 [shape = 'u32[72,128]{1,0:T(1,128)}', space=vmem, size = 0x9000, scoped, tag = 'internal scratch']
  #allocation2 [shape = 'f32[64,128]{1,0:T(8,128)}', space=vmem, size = 0x8000, scoped, tag = 'scratch operand']
  %s0 = inlined_call_operand.vmem [shape: f32[64,128], index: 0, kind: input, shape index: {}]
  %s1 = inlined_call_operand.vmem [shape: bf16[128,128], index: 1, kind: input, shape index: {}]
  %s2 = inlined_call_operand.vmem [shape: f32[1,128], index: 2, kind: input, shape index: {}]
  %s3 = inlined_call_operand.vmem [shape: f32[64,128], index: 3, kind: output, shape index: {}]
  %s4 = sld [smem:[#allocation0]]
  $region30: #{midi_rnn_forward.6} parent=0
    _
  %s6 = ssub.s32 1, %s4
  %s7 = scalar_select 0, %s6, %s4
  // Predicated region
  $region2: #{midi_rnn_forward.6} parent=0 // pred_check
    _
  $region3: #{midi_rnn_forward.6} parent=0 // pred_check_branch
    %9 = sbr.rel (0) target = $region5
  $region4: #{midi_rnn_forward.6} parent=0 // pred_region
    _
  $region5: #{midi_rnn_forward.6} parent=0 // pred_fallthru
    _
  // Predicated region
  $region6: #{midi_rnn_forward.6} parent=0 // pred_check
    _
  $region7: #{midi_rnn_forward.6} parent=0 // pred_check_branch
    %11 = sbr.rel (0) target = $region9
  $region8: #{midi_rnn_forward.6} parent=0 // pred_region
    _
  $region9: #{midi_rnn_forward.6} parent=0 // pred_fallthru
    _
  // Predicated region
  $region10: #{midi_rnn_forward.6} parent=0 // pred_check
    _
  $region11: #{midi_rnn_forward.6} parent=0 // pred_check_branch
    %13 = sbr.rel (0) target = $region13
  $region12: #{midi_rnn_forward.6} parent=0 // pred_region
    _
  $region13: #{midi_rnn_forward.6} parent=0 // pred_fallthru
    _
  %p14 = scmp.eq.s32.totalorder 0, 0
  // Predicated region
  $region14: #{midi_rnn_forward.6} parent=0 // pred_check
    %p15 = pneg %p14
  $region15: #{midi_rnn_forward.6} parent=0 // pred_check_branch
    %17 = sbr.rel (%p15) target = $region17
  $region16: #{midi_rnn_forward.6} parent=0 // pred_region
    %18 = vst [vmem:[#allocation2] sm:$0xff] 0.0
    %19 = vst [vmem:[#allocation2 + $0x8] sm:$0xff] 0.0
    %20 = vst [vmem:[#allocation2 + $0x10] sm:$0xff] 0.0
    %21 = vst [vmem:[#allocation2 + $0x18] sm:$0xff] 0.0
    %22 = vst [vmem:[#allocation2 + $0x20] sm:$0xff] 0.0
    %23 = vst [vmem:[#allocation2 + $0x28] sm:$0xff] 0.0
    %24 = vst [vmem:[#allocation2 + $0x30] sm:$0xff] 0.0
    %25 = vst [vmem:[#allocation2 + $0x38] sm:$0xff] 0.0
  $region17: #{midi_rnn_forward.6} parent=0 // pred_fallthru
    _
  %v26 = vld [vmem:[#allocation2] sm:$0xff]
  %v27 = vld [vmem:[#allocation2 + $0x8] sm:$0xff]
  %v28 = vld [vmem:[#allocation2 + $0x10] sm:$0xff]
  %v29 = vld [vmem:[#allocation2 + $0x18] sm:$0xff]
  %v30 = vld [vmem:[#allocation2 + $0x20] sm:$0xff]
  %v31 = vld [vmem:[#allocation2 + $0x28] sm:$0xff]
  %v32 = vld [vmem:[#allocation2 + $0x30] sm:$0xff]
  %v33 = vld [vmem:[#allocation2 + $0x38] sm:$0xff]
  %v34 = vld [vmem:[%s0] sm:$0xff]
  %v35 = vld [vmem:[%s0 + $0x8] sm:$0xff]
  %v36 = vld [vmem:[%s0 + $0x10] sm:$0xff]
  %v37 = vld [vmem:[%s0 + $0x18] sm:$0xff]
  %v38 = vld [vmem:[%s0 + $0x20] sm:$0xff]
  %v39 = vld [vmem:[%s0 + $0x28] sm:$0xff]
  %v40 = vld [vmem:[%s0 + $0x30] sm:$0xff]
  %v41 = vld [vmem:[%s0 + $0x38] sm:$0xff]
  %v42 = vpack.c.bf16 %v35, %v34
  %v43 = vpack.c.bf16 %v37, %v36
  %v44 = vpack.c.bf16 %v39, %v38
  %v45 = vpack.c.bf16 %v41, %v40
  %v46 = vld [vmem:[%s1] sm:$0xf]
  %v47 = vld [vmem:[%s1 + $0x4] sm:$0xf]
  %v48 = vld [vmem:[%s1 + $0x8] sm:$0xf]
  %v49 = vld [vmem:[%s1 + $0xc] sm:$0xf]
  %v50 = vld [vmem:[%s1 + $0x10] sm:$0xf]
  %v51 = vld [vmem:[%s1 + $0x14] sm:$0xf]
  %v52 = vld [vmem:[%s1 + $0x18] sm:$0xf]
  %v53 = vld [vmem:[%s1 + $0x1c] sm:$0xf]
  %v54 = vld [vmem:[%s1 + $0x20] sm:$0xf]
  %v55 = vld [vmem:[%s1 + $0x24] sm:$0xf]
  %v56 = vld [vmem:[%s1 + $0x28] sm:$0xf]
  %v57 = vld [vmem:[%s1 + $0x2c] sm:$0xf]
  %v58 = vld [vmem:[%s1 + $0x30] sm:$0xf]
  %v59 = vld [vmem:[%s1 + $0x34] sm:$0xf]
  %v60 = vld [vmem:[%s1 + $0x38] sm:$0xf]
  %v61 = vld [vmem:[%s1 + $0x3c] sm:$0xf]
  %v78 = vunpack.c.l.b16 %v46
  %v79 = vunpack.c.l.b16 %v47
  %v80 = vunpack.c.l.b16 %v48
  %v81 = vunpack.c.l.b16 %v49
  %v82 = vunpack.c.l.b16 %v50
  %v83 = vunpack.c.l.b16 %v51
  %v84 = vunpack.c.l.b16 %v52
  %v85 = vunpack.c.l.b16 %v53
  %v86 = vunpack.c.l.b16 %v54
  %v87 = vunpack.c.l.b16 %v55
  %v88 = vunpack.c.l.b16 %v56
  %v89 = vunpack.c.l.b16 %v57
  %v90 = vunpack.c.l.b16 %v58
  %v91 = vunpack.c.l.b16 %v59
  %v92 = vunpack.c.l.b16 %v60
  %v93 = vunpack.c.l.b16 %v61
  %v94 = vpack.c.b16 %v79, %v78
  %v95 = vpack.c.b16 %v81, %v80
  %v96 = vpack.c.b16 %v83, %v82
  %v97 = vpack.c.b16 %v85, %v84
  %v98 = vpack.c.b16 %v87, %v86
  %v99 = vpack.c.b16 %v89, %v88
  %v100 = vpack.c.b16 %v91, %v90
  %v101 = vpack.c.b16 %v93, %v92
  %110 = vmatpush.bf16.msra.mxu0 %v101
  %111 = vmatpush.bf16.msra.mxu0 %v100
  %112 = vmatpush.bf16.msra.mxu0 %v99
  %113 = vmatpush.bf16.msra.mxu0 %v98
  %114 = vmatpush.bf16.msra.mxu0 %v97
  %115 = vmatpush.bf16.msra.mxu0 %v96
  %116 = vmatpush.bf16.msra.mxu0 %v95
  %117 = vmatpush.bf16.msra.mxu0 %v94
  %118 = vmatmul.bf16.gmra.mxu0 %v42
  %v119 = vpop.f32.mrf.mxu0
  %v120 = vadd.f32 0.0, %v119
  %v121 = vpop.f32.mrf.mxu0
  %v122 = vadd.f32 0.0, %v121
  %123 = vmatmul.bf16.gmra.mxu0 %v43
  %v124 = vpop.f32.mrf.mxu0
  %v125 = vadd.f32 0.0, %v124
  %v126 = vpop.f32.mrf.mxu0
  %v127 = vadd.f32 0.0, %v126
  %128 = vmatmul.bf16.gmra.mxu0 %v44
  %v129 = vpop.f32.mrf.mxu0
  %v130 = vadd.f32 0.0, %v129
  %v131 = vpop.f32.mrf.mxu0
  %v132 = vadd.f32 0.0, %v131
  %133 = vmatmul.bf16.gmra.mxu0 %v45
  %v134 = vpop.f32.mrf.mxu0
  %v135 = vadd.f32 0.0, %v134
  %v136 = vpop.f32.mrf.mxu0
  %v137 = vadd.f32 0.0, %v136
  %138 = vdwg.mxu0
  %v139 = vadd.f32 %v26, %v120
  %v140 = vadd.f32 %v27, %v122
  %v141 = vadd.f32 %v28, %v125
  %v142 = vadd.f32 %v29, %v127
  %v143 = vadd.f32 %v30, %v130
  %v144 = vadd.f32 %v31, %v132
  %v145 = vadd.f32 %v32, %v135
  %v146 = vadd.f32 %v33, %v137
  %147 = vst [vmem:[#allocation2] sm:$0xff] %v139
  %148 = vst [vmem:[#allocation2 + $0x8] sm:$0xff] %v140
  %149 = vst [vmem:[#allocation2 + $0x10] sm:$0xff] %v141
  %150 = vst [vmem:[#allocation2 + $0x18] sm:$0xff] %v142
  %151 = vst [vmem:[#allocation2 + $0x20] sm:$0xff] %v143
  %152 = vst [vmem:[#allocation2 + $0x28] sm:$0xff] %v144
  %153 = vst [vmem:[#allocation2 + $0x30] sm:$0xff] %v145
  %154 = vst [vmem:[#allocation2 + $0x38] sm:$0xff] %v146
  // Predicated region
  $region18: #{midi_rnn_forward.6} parent=0 // pred_check
    %p155 = pneg %p14
  $region19: #{midi_rnn_forward.6} parent=0 // pred_check_branch
    %157 = sbr.rel (%p155) target = $region21
  $region20: #{midi_rnn_forward.6} parent=0 // pred_region
    %v158 = vld [vmem:[#allocation2] sm:$0xff]
    %v159 = vld [vmem:[#allocation2 + $0x8] sm:$0xff]
    %v160 = vld [vmem:[#allocation2 + $0x10] sm:$0xff]
    %v161 = vld [vmem:[#allocation2 + $0x18] sm:$0xff]
    %v162 = vld [vmem:[#allocation2 + $0x20] sm:$0xff]
    %v163 = vld [vmem:[#allocation2 + $0x28] sm:$0xff]
    %v164 = vld [vmem:[#allocation2 + $0x30] sm:$0xff]
    %v165 = vld [vmem:[#allocation2 + $0x38] sm:$0xff]
    %v166 = vld [vmem:[%s2] sm:$0x1]
    %v168 = vperm.slane %v166, 0
    %v170 = vadd.f32 %v158, %v168
    %v171 = vadd.f32 %v159, %v168
    %v172 = vadd.f32 %v160, %v168
    %v173 = vadd.f32 %v161, %v168
    %v174 = vadd.f32 %v162, %v168
    %v175 = vadd.f32 %v163, %v168
    %v176 = vadd.f32 %v164, %v168
    %v177 = vadd.f32 %v165, %v168
    %178 = vst [vmem:[%s3] sm:$0xff] %v170
    %179 = vst [vmem:[%s3 + $0x8] sm:$0xff] %v171
    %180 = vst [vmem:[%s3 + $0x10] sm:$0xff] %v172
    %181 = vst [vmem:[%s3 + $0x18] sm:$0xff] %v173
    %182 = vst [vmem:[%s3 + $0x20] sm:$0xff] %v174
    %183 = vst [vmem:[%s3 + $0x28] sm:$0xff] %v175
    %184 = vst [vmem:[%s3 + $0x30] sm:$0xff] %v176
    %185 = vst [vmem:[%s3 + $0x38] sm:$0xff] %v177
  $region21: #{midi_rnn_forward.6} parent=0 // pred_fallthru
    _
  // Predicated region
  $region22: #{midi_rnn_forward.6} parent=0 // pred_check
    _
  $region23: #{midi_rnn_forward.6} parent=0 // pred_check_branch
    %187 = sbr.rel (0) target = $region25
  $region24: #{midi_rnn_forward.6} parent=0 // pred_region
    _
  $region25: #{midi_rnn_forward.6} parent=0 // pred_fallthru
    _
  // Predicated region
  $region26: #{midi_rnn_forward.6} parent=0 // pred_check
    _
  $region27: #{midi_rnn_forward.6} parent=0 // pred_check_branch
    %189 = sbr.rel (0) target = $region29
  $region28: #{midi_rnn_forward.6} parent=0 // pred_region
    _
  $region29: #{midi_rnn_forward.6} parent=0 // pred_fallthru
    _

// kernel: midi_rnn_forward.7
$region0: #{midi_rnn_forward.7}
  #allocation0 [shape = 'u32[]', space=smem, size = 0x4, offset = 0x4, fixed_abs, tag = 'smem constant byte address 0x4 - core index']
  #allocation1 [shape = 'u32[72,128]{1,0:T(1,128)}', space=vmem, size = 0x9000, scoped, tag = 'internal scratch']
  #allocation2 [shape = 'f32[8,128]{1,0:T(8,128)}', space=vmem, size = 0x1000, scoped, tag = 'scratch operand']
  #allocation3 [shape = 'bf16[128,128]{1,0:T(8,128)(2,1)}', space=vmem, size = 0x8000, scoped, tag = 'scratch operand']
  #allocation4 [shape = 's32[1]{0}', space=sflag, size = 0x4, scoped, tag = 'scratch operand']
  #allocation5 [shape = 's32[]', space=sflag, size = 0x4, offset = 0, fixed_abs, tag = 'sflag constant byte address 0x0 - dummy sync flag']
  #allocation6 [shape = 's32[]', space=sflag, size = 0x4, offset = 0, fixed_abs, tag = 'sflag constant byte address 0x0 - dummy sync flag']
  #allocation7 [shape = 'u32[]', space=smem, size = 0x4, offset = 0x44, fixed_abs, tag = 'smem constant byte address 0x44 - assertion arg 0']
  #allocation8 [shape = 'u32[]', space=smem, size = 0x4, offset = 0x48, fixed_abs, tag = 'smem constant byte address 0x48 - assertion arg 1']
  %s0 = inlined_call_operand.vmem [shape: f32[8,8,128], index: 0, kind: input, shape index: {}]
  %s1 = inlined_call_operand.hbm [shape: bf16[128,128], index: 1, kind: input, shape index: {}]
  %s2 = inlined_call_operand.vmem [shape: f32[8,8,128], index: 2, kind: output, shape index: {}]
  %s3 = sld [smem:[#allocation0]]
  $region22: #{midi_rnn_forward.7} parent=0
    _
  %s5 = ssub.s32 1, %s3
  %s6 = scalar_select 0, %s5, %s3
  // Predicated region
  $region2: #{midi_rnn_forward.7} parent=0 // pred_check
    _
  $region3: #{midi_rnn_forward.7} parent=0 // pred_check_branch
    %8 = sbr.rel (0) target = $region5
  $region4: #{midi_rnn_forward.7} parent=0 // pred_region
    _
  $region5: #{midi_rnn_forward.7} parent=0 // pred_fallthru
    _
  %p9 = scmp.eq.s32.totalorder 0, 0
  // Predicated region
  $region6: #{midi_rnn_forward.7} parent=0 // pred_check
    %p10 = pneg %p9
  $region7: #{midi_rnn_forward.7} parent=0 // pred_check_branch
    %12 = sbr.rel (%p10) target = $region9
  $region8: #{midi_rnn_forward.7} parent=0 // pred_region
    // Predicated region
    $region10: #{midi_rnn_forward.7} parent=8 // pred_check
      _
    $region11: #{midi_rnn_forward.7} parent=8 // pred_check_branch
      %14 = sbr.rel target = $region13
    $region12: #{midi_rnn_forward.7} parent=8 // pred_region
      %15 = sst [smem:[#allocation7]] [#allocation6]
      %16 = sst [smem:[#allocation8]] [#allocation5]
    $region13: #{midi_rnn_forward.7} parent=8 // pred_fallthru
      _
    %18 = shalt.err (0)
    %s20 = sshll.u32 %s1, 4
    %s21 = int_to_ptr.hbm [resolvable:$true] %s20
    %s22 = sshll.u32 [#allocation3], 4
    %s23 = int_to_ptr.vmem [resolvable:$true] %s22
    %25 = dma.hbm_to_vmem [thread:$0]  %s21, 1024, %s23, [#allocation4]
    %s26 = smul.u32 4, 16
    %s27 = smul.u32 %s26, 1
    %s28 = sshll.u32 %s27, 4
    %29 = dma.done [#allocation4], %s28
    %30 = vst [vmem:[#allocation2] sm:$0xff] 0.0
  $region9: #{midi_rnn_forward.7} parent=0 // pred_fallthru
    _
  %v31 = vld [vmem:[#allocation3] sm:$0xf]
  %v32 = vld [vmem:[#allocation3 + $0x4] sm:$0xf]
  %v33 = vld [vmem:[#allocation3 + $0x8] sm:$0xf]
  %v34 = vld [vmem:[#allocation3 + $0xc] sm:$0xf]
  %v35 = vld [vmem:[#allocation3 + $0x10] sm:$0xf]
  %v36 = vld [vmem:[#allocation3 + $0x14] sm:$0xf]
  %v37 = vld [vmem:[#allocation3 + $0x18] sm:$0xf]
  %v38 = vld [vmem:[#allocation3 + $0x1c] sm:$0xf]
  %v39 = vld [vmem:[#allocation3 + $0x20] sm:$0xf]
  %v40 = vld [vmem:[#allocation3 + $0x24] sm:$0xf]
  %v41 = vld [vmem:[#allocation3 + $0x28] sm:$0xf]
  %v42 = vld [vmem:[#allocation3 + $0x2c] sm:$0xf]
  %v43 = vld [vmem:[#allocation3 + $0x30] sm:$0xf]
  %v44 = vld [vmem:[#allocation3 + $0x34] sm:$0xf]
  %v45 = vld [vmem:[#allocation3 + $0x38] sm:$0xf]
  %v46 = vld [vmem:[#allocation3 + $0x3c] sm:$0xf]
  %v47 = vld [vmem:[#allocation2] sm:$0xff]
  %v48 = vld [vmem:[%s0] sm:$0xff]
  %v49 = vpack.c.bf16 %v47, %v47
  %v66 = vunpack.c.l.b16 %v31
  %v67 = vunpack.c.l.b16 %v32
  %v68 = vunpack.c.l.b16 %v33
  %v69 = vunpack.c.l.b16 %v34
  %v70 = vunpack.c.l.b16 %v35
  %v71 = vunpack.c.l.b16 %v36
  %v72 = vunpack.c.l.b16 %v37
  %v73 = vunpack.c.l.b16 %v38
  %v74 = vunpack.c.l.b16 %v39
  %v75 = vunpack.c.l.b16 %v40
  %v76 = vunpack.c.l.b16 %v41
  %v77 = vunpack.c.l.b16 %v42
  %v78 = vunpack.c.l.b16 %v43
  %v79 = vunpack.c.l.b16 %v44
  %v80 = vunpack.c.l.b16 %v45
  %v81 = vunpack.c.l.b16 %v46
  %v82 = vpack.c.b16 %v67, %v66
  %v83 = vpack.c.b16 %v69, %v68
  %v84 = vpack.c.b16 %v71, %v70
  %v85 = vpack.c.b16 %v73, %v72
  %v86 = vpack.c.b16 %v75, %v74
  %v87 = vpack.c.b16 %v77, %v76
  %v88 = vpack.c.b16 %v79, %v78
  %v89 = vpack.c.b16 %v81, %v80
  %98 = vmatpush.bf16.msra.mxu0 %v89
  %99 = vmatpush.bf16.msra.mxu0 %v88
  %100 = vmatpush.bf16.msra.mxu0 %v87
  %101 = vmatpush.bf16.msra.mxu0 %v86
  %102 = vmatpush.bf16.msra.mxu0 %v85
  %103 = vmatpush.bf16.msra.mxu0 %v84
  %104 = vmatpush.bf16.msra.mxu0 %v83
  %105 = vmatpush.bf16.msra.mxu0 %v82
  %106 = vmatmul.bf16.gmra.mxu0 %v49
  %v107 = vpop.f32.mrf.mxu0
  %v108 = vadd.f32 0.0, %v107
  %v109 = vpop.f32.mrf.mxu0
  %110 = vdwg.mxu0
  %v111 = vadd.f32 %v48, %v108
  %v112 = vtanh.pop %v111
  %113 = vst [vmem:[%s2] sm:$0xff] %v112
  %s114 = scalar_lea.vmem %s0, 8
  %v115 = vld [vmem:[%s114] sm:$0xff]
  %v116 = vpack.c.bf16 %v112, %v112
  %117 = vmatpush.bf16.msra.mxu0 %v89
  %118 = vmatpush.bf16.msra.mxu0 %v88
  %119 = vmatpush.bf16.msra.mxu0 %v87
  %120 = vmatpush.bf16.msra.mxu0 %v86
  %121 = vmatpush.bf16.msra.mxu0 %v85
  %122 = vmatpush.bf16.msra.mxu0 %v84
  %123 = vmatpush.bf16.msra.mxu0 %v83
  %124 = vmatpush.bf16.msra.mxu0 %v82
  %125 = vmatmul.bf16.gmra.mxu0 %v116
  %v126 = vpop.f32.mrf.mxu0
  %v127 = vadd.f32 0.0, %v126
  %v128 = vpop.f32.mrf.mxu0
  %129 = vdwg.mxu0
  %v130 = vadd.f32 %v115, %v127
  %v131 = vtanh.pop %v130
  %s132 = scalar_lea.vmem %s2, 8
  %133 = vst [vmem:[%s132] sm:$0xff] %v131
  %s134 = scalar_lea.vmem %s0, 16
  %v135 = vld [vmem:[%s134] sm:$0xff]
  %v136 = vpack.c.bf16 %v131, %v131
  %137 = vmatpush.bf16.msra.mxu0 %v89
  %138 = vmatpush.bf16.msra.mxu0 %v88
  %139 = vmatpush.bf16.msra.mxu0 %v87
  %140 = vmatpush.bf16.msra.mxu0 %v86
  %141 = vmatpush.bf16.msra.mxu0 %v85
  %142 = vmatpush.bf16.msra.mxu0 %v84
  %143 = vmatpush.bf16.msra.mxu0 %v83
  %144 = vmatpush.bf16.msra.mxu0 %v82
  %145 = vmatmul.bf16.gmra.mxu0 %v136
  %v146 = vpop.f32.mrf.mxu0
  %v147 = vadd.f32 0.0, %v146
  %v148 = vpop.f32.mrf.mxu0
  %149 = vdwg.mxu0
  %v150 = vadd.f32 %v135, %v147
  %v151 = vtanh.pop %v150
  %s152 = scalar_lea.vmem %s2, 16
  %153 = vst [vmem:[%s152] sm:$0xff] %v151
  %s154 = scalar_lea.vmem %s0, 24
  %v155 = vld [vmem:[%s154] sm:$0xff]
  %v156 = vpack.c.bf16 %v151, %v151
  %157 = vmatpush.bf16.msra.mxu0 %v89
  %158 = vmatpush.bf16.msra.mxu0 %v88
  %159 = vmatpush.bf16.msra.mxu0 %v87
  %160 = vmatpush.bf16.msra.mxu0 %v86
  %161 = vmatpush.bf16.msra.mxu0 %v85
  %162 = vmatpush.bf16.msra.mxu0 %v84
  %163 = vmatpush.bf16.msra.mxu0 %v83
  %164 = vmatpush.bf16.msra.mxu0 %v82
  %165 = vmatmul.bf16.gmra.mxu0 %v156
  %v166 = vpop.f32.mrf.mxu0
  %v167 = vadd.f32 0.0, %v166
  %v168 = vpop.f32.mrf.mxu0
  %169 = vdwg.mxu0
  %v170 = vadd.f32 %v155, %v167
  %v171 = vtanh.pop %v170
  %s172 = scalar_lea.vmem %s2, 24
  %173 = vst [vmem:[%s172] sm:$0xff] %v171
  %s174 = scalar_lea.vmem %s0, 32
  %v175 = vld [vmem:[%s174] sm:$0xff]
  %v176 = vpack.c.bf16 %v171, %v171
  %177 = vmatpush.bf16.msra.mxu0 %v89
  %178 = vmatpush.bf16.msra.mxu0 %v88
  %179 = vmatpush.bf16.msra.mxu0 %v87
  %180 = vmatpush.bf16.msra.mxu0 %v86
  %181 = vmatpush.bf16.msra.mxu0 %v85
  %182 = vmatpush.bf16.msra.mxu0 %v84
  %183 = vmatpush.bf16.msra.mxu0 %v83
  %184 = vmatpush.bf16.msra.mxu0 %v82
  %185 = vmatmul.bf16.gmra.mxu0 %v176
  %v186 = vpop.f32.mrf.mxu0
  %v187 = vadd.f32 0.0, %v186
  %v188 = vpop.f32.mrf.mxu0
  %189 = vdwg.mxu0
  %v190 = vadd.f32 %v175, %v187
  %v191 = vtanh.pop %v190
  %s192 = scalar_lea.vmem %s2, 32
  %193 = vst [vmem:[%s192] sm:$0xff] %v191
  %s194 = scalar_lea.vmem %s0, 40
  %v195 = vld [vmem:[%s194] sm:$0xff]
  %v196 = vpack.c.bf16 %v191, %v191
  %197 = vmatpush.bf16.msra.mxu0 %v89
  %198 = vmatpush.bf16.msra.mxu0 %v88
  %199 = vmatpush.bf16.msra.mxu0 %v87
  %200 = vmatpush.bf16.msra.mxu0 %v86
  %201 = vmatpush.bf16.msra.mxu0 %v85
  %202 = vmatpush.bf16.msra.mxu0 %v84
  %203 = vmatpush.bf16.msra.mxu0 %v83
  %204 = vmatpush.bf16.msra.mxu0 %v82
  %205 = vmatmul.bf16.gmra.mxu0 %v196
  %v206 = vpop.f32.mrf.mxu0
  %v207 = vadd.f32 0.0, %v206
  %v208 = vpop.f32.mrf.mxu0
  %209 = vdwg.mxu0
  %v210 = vadd.f32 %v195, %v207
  %v211 = vtanh.pop %v210
  %s212 = scalar_lea.vmem %s2, 40
  %213 = vst [vmem:[%s212] sm:$0xff] %v211
  %s214 = scalar_lea.vmem %s0, 48
  %v215 = vld [vmem:[%s214] sm:$0xff]
  %v216 = vpack.c.bf16 %v211, %v211
  %217 = vmatpush.bf16.msra.mxu0 %v89
  %218 = vmatpush.bf16.msra.mxu0 %v88
  %219 = vmatpush.bf16.msra.mxu0 %v87
  %220 = vmatpush.bf16.msra.mxu0 %v86
  %221 = vmatpush.bf16.msra.mxu0 %v85
  %222 = vmatpush.bf16.msra.mxu0 %v84
  %223 = vmatpush.bf16.msra.mxu0 %v83
  %224 = vmatpush.bf16.msra.mxu0 %v82
  %225 = vmatmul.bf16.gmra.mxu0 %v216
  %v226 = vpop.f32.mrf.mxu0
  %v227 = vadd.f32 0.0, %v226
  %v228 = vpop.f32.mrf.mxu0
  %229 = vdwg.mxu0
  %v230 = vadd.f32 %v215, %v227
  %v231 = vtanh.pop %v230
  %s232 = scalar_lea.vmem %s2, 48
  %233 = vst [vmem:[%s232] sm:$0xff] %v231
  %s234 = scalar_lea.vmem %s0, 56
  %v235 = vld [vmem:[%s234] sm:$0xff]
  %v236 = vpack.c.bf16 %v231, %v231
  %237 = vmatpush.bf16.msra.mxu0 %v89
  %238 = vmatpush.bf16.msra.mxu0 %v88
  %239 = vmatpush.bf16.msra.mxu0 %v87
  %240 = vmatpush.bf16.msra.mxu0 %v86
  %241 = vmatpush.bf16.msra.mxu0 %v85
  %242 = vmatpush.bf16.msra.mxu0 %v84
  %243 = vmatpush.bf16.msra.mxu0 %v83
  %244 = vmatpush.bf16.msra.mxu0 %v82
  %245 = vmatmul.bf16.gmra.mxu0 %v236
  %v246 = vpop.f32.mrf.mxu0
  %v247 = vadd.f32 0.0, %v246
  %v248 = vpop.f32.mrf.mxu0
  %249 = vdwg.mxu0
  %v250 = vadd.f32 %v235, %v247
  %v251 = vtanh.pop %v250
  %s252 = scalar_lea.vmem %s2, 56
  %253 = vst [vmem:[%s252] sm:$0xff] %v251
  %254 = vst [vmem:[#allocation2] sm:$0xff] %v251
  // Predicated region
  $region14: #{midi_rnn_forward.7} parent=0 // pred_check
    _
  $region15: #{midi_rnn_forward.7} parent=0 // pred_check_branch
    %256 = sbr.rel (0) target = $region17
  $region16: #{midi_rnn_forward.7} parent=0 // pred_region
    _
  $region17: #{midi_rnn_forward.7} parent=0 // pred_fallthru
    _
  // Predicated region
  $region18: #{midi_rnn_forward.7} parent=0 // pred_check
    _
  $region19: #{midi_rnn_forward.7} parent=0 // pred_check_branch
    %258 = sbr.rel (0) target = $region21
  $region20: #{midi_rnn_forward.7} parent=0 // pred_region
    _
  $region21: #{midi_rnn_forward.7} parent=0 // pred_fallthru
    _
  %259 = vsyncmov [#allocation4]
  %s260 = vpop.sfrf %259
  %p261 = scmp.eq.s32.totalorder %s260, 0
  %p262 = pneg %p261
  %264 = shalt.err (%p262)

// kernel: midi_rnn_forward.10
$region0: #{midi_rnn_forward.10}
  #allocation0 [shape = 'u32[]', space=smem, size = 0x4, offset = 0x4, fixed_abs, tag = 'smem constant byte address 0x4 - core index']
  #allocation1 [shape = 'u32[72,128]{1,0:T(1,128)}', space=vmem, size = 0x9000, scoped, tag = 'internal scratch']
  #allocation2 [shape = 'f32[64,128]{1,0:T(8,128)}', space=vmem, size = 0x8000, scoped, tag = 'scratch operand']
  %s0 = inlined_call_operand.vmem [shape: f32[64,128], index: 0, kind: input, shape index: {}]
  %s1 = inlined_call_operand.hbm [shape: bf16[128,128], index: 1, kind: input, shape index: {}]
  %s2 = inlined_call_operand.vmem [shape: f32[1,128], index: 2, kind: input, shape index: {}]
  %s3 = inlined_call_operand.vmem [shape: f32[64,128], index: 3, kind: output, shape index: {}]
  %s4 = sld [smem:[#allocation0]]
  $region34: #{midi_rnn_forward.10} parent=0
    _
  %s6 = ssub.s32 1, %s4
  %s7 = scalar_select 0, %s6, %s4
  $region1: #{midi_rnn_forward.10} parent=0
    #allocation3 [shape = 'u8[32768]{0}', space=vmem, size = 0x8000, scoped, tag = 'input window, operand 1, single buffered']
    #allocation4 [shape = 's32[1]{0}', space=sflag, size = 0x4, scoped, tag = 'scoped memory for midi_rnn_forward.10']
    %8 = vsyncpa [#allocation4], 0
    // Predicated region
    $region2: #{midi_rnn_forward.10} parent=1 // pred_check
      _
    $region3: #{midi_rnn_forward.10} parent=1 // pred_check_branch
      %10 = sbr.rel (0) target = $region5
    $region4: #{midi_rnn_forward.10} parent=1 // pred_region
      _
    $region5: #{midi_rnn_forward.10} parent=1 // pred_fallthru
      _
    // Predicated region
    $region6: #{midi_rnn_forward.10} parent=1 // pred_check
      _
    $region7: #{midi_rnn_forward.10} parent=1 // pred_check_branch
      %12 = sbr.rel (0) target = $region9
    $region8: #{midi_rnn_forward.10} parent=1 // pred_region
      %14 = vsyncadd [#allocation4], 0
      %s15 = sshll.u32 %s1, 4
      %s16 = int_to_ptr.hbm [resolvable:$true] %s15
      %s17 = sshll.u32 [#allocation3], 4
      %s18 = int_to_ptr.vmem [resolvable:$true] %s17
      %23 = dma.hbm_to_vmem [thread:$0]  %s16, 1024, %s18, [#allocation4], 64, 64, 4
    $region9: #{midi_rnn_forward.10} parent=1 // pred_fallthru
      _
    // Predicated region
    $region10: #{midi_rnn_forward.10} parent=1 // pred_check
      _
    $region11: #{midi_rnn_forward.10} parent=1 // pred_check_branch
      %25 = sbr.rel (0) target = $region13
    $region12: #{midi_rnn_forward.10} parent=1 // pred_region
      _
    $region13: #{midi_rnn_forward.10} parent=1 // pred_fallthru
      _
    // Predicated region
    $region14: #{midi_rnn_forward.10} parent=1 // pred_check
      _
    $region15: #{midi_rnn_forward.10} parent=1 // pred_check_branch
      %27 = sbr.rel (0) target = $region17
    $region16: #{midi_rnn_forward.10} parent=1 // pred_region
      %29 = dma.done [#allocation4], 1024
    $region17: #{midi_rnn_forward.10} parent=1 // pred_fallthru
      _
    %p30 = scmp.eq.s32.totalorder 0, 0
    // Predicated region
    $region18: #{midi_rnn_forward.10} parent=1 // pred_check
      %p31 = pneg %p30
    $region19: #{midi_rnn_forward.10} parent=1 // pred_check_branch
      %33 = sbr.rel (%p31) target = $region21
    $region20: #{midi_rnn_forward.10} parent=1 // pred_region
      %34 = vst [vmem:[#allocation2] sm:$0xff] 0.0
      %35 = vst [vmem:[#allocation2 + $0x8] sm:$0xff] 0.0
      %36 = vst [vmem:[#allocation2 + $0x10] sm:$0xff] 0.0
      %37 = vst [vmem:[#allocation2 + $0x18] sm:$0xff] 0.0
      %38 = vst [vmem:[#allocation2 + $0x20] sm:$0xff] 0.0
      %39 = vst [vmem:[#allocation2 + $0x28] sm:$0xff] 0.0
      %40 = vst [vmem:[#allocation2 + $0x30] sm:$0xff] 0.0
      %41 = vst [vmem:[#allocation2 + $0x38] sm:$0xff] 0.0
    $region21: #{midi_rnn_forward.10} parent=1 // pred_fallthru
      _
    %v42 = vld [vmem:[#allocation2] sm:$0xff]
    %v43 = vld [vmem:[#allocation2 + $0x8] sm:$0xff]
    %v44 = vld [vmem:[#allocation2 + $0x10] sm:$0xff]
    %v45 = vld [vmem:[#allocation2 + $0x18] sm:$0xff]
    %v46 = vld [vmem:[#allocation2 + $0x20] sm:$0xff]
    %v47 = vld [vmem:[#allocation2 + $0x28] sm:$0xff]
    %v48 = vld [vmem:[#allocation2 + $0x30] sm:$0xff]
    %v49 = vld [vmem:[#allocation2 + $0x38] sm:$0xff]
    %v50 = vld [vmem:[%s0] sm:$0xff]
    %v51 = vld [vmem:[%s0 + $0x8] sm:$0xff]
    %v52 = vld [vmem:[%s0 + $0x10] sm:$0xff]
    %v53 = vld [vmem:[%s0 + $0x18] sm:$0xff]
    %v54 = vld [vmem:[%s0 + $0x20] sm:$0xff]
    %v55 = vld [vmem:[%s0 + $0x28] sm:$0xff]
    %v56 = vld [vmem:[%s0 + $0x30] sm:$0xff]
    %v57 = vld [vmem:[%s0 + $0x38] sm:$0xff]
    %v58 = vpack.c.bf16 %v51, %v50
    %v59 = vpack.c.bf16 %v53, %v52
    %v60 = vpack.c.bf16 %v55, %v54
    %v61 = vpack.c.bf16 %v57, %v56
    %v62 = vld [vmem:[#allocation3] sm:$0xf]
    %v63 = vld [vmem:[#allocation3 + $0x4] sm:$0xf]
    %v64 = vld [vmem:[#allocation3 + $0x8] sm:$0xf]
    %v65 = vld [vmem:[#allocation3 + $0xc] sm:$0xf]
    %v66 = vld [vmem:[#allocation3 + $0x10] sm:$0xf]
    %v67 = vld [vmem:[#allocation3 + $0x14] sm:$0xf]
    %v68 = vld [vmem:[#allocation3 + $0x18] sm:$0xf]
    %v69 = vld [vmem:[#allocation3 + $0x1c] sm:$0xf]
    %v70 = vld [vmem:[#allocation3 + $0x20] sm:$0xf]
    %v71 = vld [vmem:[#allocation3 + $0x24] sm:$0xf]
    %v72 = vld [vmem:[#allocation3 + $0x28] sm:$0xf]
    %v73 = vld [vmem:[#allocation3 + $0x2c] sm:$0xf]
    %v74 = vld [vmem:[#allocation3 + $0x30] sm:$0xf]
    %v75 = vld [vmem:[#allocation3 + $0x34] sm:$0xf]
    %v76 = vld [vmem:[#allocation3 + $0x38] sm:$0xf]
    %v77 = vld [vmem:[#allocation3 + $0x3c] sm:$0xf]
    %v94 = vunpack.c.l.b16 %v62
    %v95 = vunpack.c.l.b16 %v63
    %v96 = vunpack.c.l.b16 %v64
    %v97 = vunpack.c.l.b16 %v65
    %v98 = vunpack.c.l.b16 %v66
    %v99 = vunpack.c.l.b16 %v67
    %v100 = vunpack.c.l.b16 %v68
    %v101 = vunpack.c.l.b16 %v69
    %v102 = vunpack.c.l.b16 %v70
    %v103 = vunpack.c.l.b16 %v71
    %v104 = vunpack.c.l.b16 %v72
    %v105 = vunpack.c.l.b16 %v73
    %v106 = vunpack.c.l.b16 %v74
    %v107 = vunpack.c.l.b16 %v75
    %v108 = vunpack.c.l.b16 %v76
    %v109 = vunpack.c.l.b16 %v77
    %v110 = vpack.c.b16 %v95, %v94
    %v111 = vpack.c.b16 %v97, %v96
    %v112 = vpack.c.b16 %v99, %v98
    %v113 = vpack.c.b16 %v101, %v100
    %v114 = vpack.c.b16 %v103, %v102
    %v115 = vpack.c.b16 %v105, %v104
    %v116 = vpack.c.b16 %v107, %v106
    %v117 = vpack.c.b16 %v109, %v108
    %126 = vmatpush.bf16.msra.mxu0 %v117
    %127 = vmatpush.bf16.msra.mxu0 %v116
    %128 = vmatpush.bf16.msra.mxu0 %v115
    %129 = vmatpush.bf16.msra.mxu0 %v114
    %130 = vmatpush.bf16.msra.mxu0 %v113
    %131 = vmatpush.bf16.msra.mxu0 %v112
    %132 = vmatpush.bf16.msra.mxu0 %v111
    %133 = vmatpush.bf16.msra.mxu0 %v110
    %134 = vmatmul.bf16.gmra.mxu0 %v58
    %v135 = vpop.f32.mrf.mxu0
    %v136 = vadd.f32 0.0, %v135
    %v137 = vpop.f32.mrf.mxu0
    %v138 = vadd.f32 0.0, %v137
    %139 = vmatmul.bf16.gmra.mxu0 %v59
    %v140 = vpop.f32.mrf.mxu0
    %v141 = vadd.f32 0.0, %v140
    %v142 = vpop.f32.mrf.mxu0
    %v143 = vadd.f32 0.0, %v142
    %144 = vmatmul.bf16.gmra.mxu0 %v60
    %v145 = vpop.f32.mrf.mxu0
    %v146 = vadd.f32 0.0, %v145
    %v147 = vpop.f32.mrf.mxu0
    %v148 = vadd.f32 0.0, %v147
    %149 = vmatmul.bf16.gmra.mxu0 %v61
    %v150 = vpop.f32.mrf.mxu0
    %v151 = vadd.f32 0.0, %v150
    %v152 = vpop.f32.mrf.mxu0
    %v153 = vadd.f32 0.0, %v152
    %154 = vdwg.mxu0
    %v155 = vadd.f32 %v42, %v136
    %v156 = vadd.f32 %v43, %v138
    %v157 = vadd.f32 %v44, %v141
    %v158 = vadd.f32 %v45, %v143
    %v159 = vadd.f32 %v46, %v146
    %v160 = vadd.f32 %v47, %v148
    %v161 = vadd.f32 %v48, %v151
    %v162 = vadd.f32 %v49, %v153
    %163 = vst [vmem:[#allocation2] sm:$0xff] %v155
    %164 = vst [vmem:[#allocation2 + $0x8] sm:$0xff] %v156
    %165 = vst [vmem:[#allocation2 + $0x10] sm:$0xff] %v157
    %166 = vst [vmem:[#allocation2 + $0x18] sm:$0xff] %v158
    %167 = vst [vmem:[#allocation2 + $0x20] sm:$0xff] %v159
    %168 = vst [vmem:[#allocation2 + $0x28] sm:$0xff] %v160
    %169 = vst [vmem:[#allocation2 + $0x30] sm:$0xff] %v161
    %170 = vst [vmem:[#allocation2 + $0x38] sm:$0xff] %v162
    // Predicated region
    $region22: #{midi_rnn_forward.10} parent=1 // pred_check
      %p171 = pneg %p30
    $region23: #{midi_rnn_forward.10} parent=1 // pred_check_branch
      %173 = sbr.rel (%p171) target = $region25
    $region24: #{midi_rnn_forward.10} parent=1 // pred_region
      %v174 = vld [vmem:[#allocation2] sm:$0xff]
      %v175 = vld [vmem:[#allocation2 + $0x8] sm:$0xff]
      %v176 = vld [vmem:[#allocation2 + $0x10] sm:$0xff]
      %v177 = vld [vmem:[#allocation2 + $0x18] sm:$0xff]
      %v178 = vld [vmem:[#allocation2 + $0x20] sm:$0xff]
      %v179 = vld [vmem:[#allocation2 + $0x28] sm:$0xff]
      %v180 = vld [vmem:[#allocation2 + $0x30] sm:$0xff]
      %v181 = vld [vmem:[#allocation2 + $0x38] sm:$0xff]
      %v182 = vld [vmem:[%s2] sm:$0x1]
      %v184 = vperm.slane %v182, 0
      %v186 = vadd.f32 %v174, %v184
      %v187 = vadd.f32 %v175, %v184
      %v188 = vadd.f32 %v176, %v184
      %v189 = vadd.f32 %v177, %v184
      %v190 = vadd.f32 %v178, %v184
      %v191 = vadd.f32 %v179, %v184
      %v192 = vadd.f32 %v180, %v184
      %v193 = vadd.f32 %v181, %v184
      %v194 = vmax.f32 %v186, 0.0
      %v195 = vmax.f32 %v187, 0.0
      %v196 = vmax.f32 %v188, 0.0
      %v197 = vmax.f32 %v189, 0.0
      %v198 = vmax.f32 %v190, 0.0
      %v199 = vmax.f32 %v191, 0.0
      %v200 = vmax.f32 %v192, 0.0
      %v201 = vmax.f32 %v193, 0.0
      %202 = vst [vmem:[%s3] sm:$0xff] %v194
      %203 = vst [vmem:[%s3 + $0x8] sm:$0xff] %v195
      %204 = vst [vmem:[%s3 + $0x10] sm:$0xff] %v196
      %205 = vst [vmem:[%s3 + $0x18] sm:$0xff] %v197
      %206 = vst [vmem:[%s3 + $0x20] sm:$0xff] %v198
      %207 = vst [vmem:[%s3 + $0x28] sm:$0xff] %v199
      %208 = vst [vmem:[%s3 + $0x30] sm:$0xff] %v200
      %209 = vst [vmem:[%s3 + $0x38] sm:$0xff] %v201
    $region25: #{midi_rnn_forward.10} parent=1 // pred_fallthru
      _
    // Predicated region
    $region26: #{midi_rnn_forward.10} parent=1 // pred_check
      _
    $region27: #{midi_rnn_forward.10} parent=1 // pred_check_branch
      %211 = sbr.rel (0) target = $region29
    $region28: #{midi_rnn_forward.10} parent=1 // pred_region
      _
    $region29: #{midi_rnn_forward.10} parent=1 // pred_fallthru
      _
    // Predicated region
    $region30: #{midi_rnn_forward.10} parent=1 // pred_check
      _
    $region31: #{midi_rnn_forward.10} parent=1 // pred_check_branch
      %213 = sbr.rel (0) target = $region33
    $region32: #{midi_rnn_forward.10} parent=1 // pred_region
      _
    $region33: #{midi_rnn_forward.10} parent=1 // pred_fallthru
      _
    %214 = vsyncpa [#allocation4], 1

</llo_original>
